<compile_context>
chip_gen: v5e
topology: v5e:2x2
jax: 0.10.0
libtpu: 0.0.40
codegen_flags: <defaults>
</compile_context>

<pallas_src>
import numpy as np
import jax
import jax.numpy as jnp
from jax.experimental import pallas as pl
from jax.experimental.pallas import tpu as pltpu

# ---------------- config (mirrors ptBEVnet defaults, at small sizes) ----------
FEA_DIM = 3                 # fea_dim
OUT_PT_FEA_DIM = 64         # out_pt_fea_dim
GRID_SIZE = (16, 16)        # grid_size
MAX_PT_PER_ENCODE = 64      # max_pt_per_encode
KERNEL_SIZE = 3             # kernal_size (local max pool)
N_CLASS = 16                # synthetic BEV_net output channels
COUT_PAD = 128              # conv output channels padded to a full 128-lane row
BN_EPS = 1e-5

TN_MLP = 512                # point rows per PointNet MLP step (was 256)
TN_SC = 256                 # point rows per scatter-max step (was 128)
TV = 128                    # voxels per scatter-max output block
VCHUNK = 8                  # voxels reduced per static inner chunk (stays in-vreg)


def _round_up(x, m):
    return (x + m - 1) // m * m


def _feat_dtype():
    # bf16 feature path only where the VPU is bf16-native (v6e / v7x); on
    # v4 / v5e keep f32 so the select/max chain does not pay per-vreg converts.
    try:
        kind = jax.devices()[0].device_kind.lower()
    except Exception:
        return jnp.float32
    return jnp.bfloat16 if ("v6" in kind or "v7" in kind) else jnp.float32


# ---------------------------- PointNet MLP kernel -----------------------------
# BNs are folded into the Linear weights host-side:
#   BN0 -> into W1 rows, BN1/BN2/BN3 -> into W1/W2/W3 columns + biases.
def _pointnet_kernel(x_ref, w1_ref, b1_ref, w2_ref, b2_ref,
                     w3_ref, b3_ref, w4_ref, b4_ref, o_ref):
    h = jnp.dot(x_ref[...].astype(jnp.bfloat16), w1_ref[...],
                preferred_element_type=jnp.float32) + b1_ref[...]
    h = jnp.maximum(h, 0.0)
    h = jnp.dot(h.astype(jnp.bfloat16), w2_ref[...],
                preferred_element_type=jnp.float32) + b2_ref[...]
    h = jnp.maximum(h, 0.0)
    h = jnp.dot(h.astype(jnp.bfloat16), w3_ref[...],
                preferred_element_type=jnp.float32) + b3_ref[...]
    h = jnp.maximum(h, 0.0)
    out = jnp.dot(h.astype(jnp.bfloat16), w4_ref[...],
                  preferred_element_type=jnp.float32) + b4_ref[...]
    o_ref[...] = out.astype(o_ref.dtype)


def pointnet_mlp(x_pad, mlp_params, out_dtype):
    n_pad = x_pad.shape[0]

    def full_spec(a):
        nd = a.ndim
        return pl.BlockSpec(a.shape, lambda i, _nd=nd: (0,) * _nd)

    in_specs = [pl.BlockSpec((TN_MLP, FEA_DIM), lambda i: (i, 0))] + \
               [full_spec(p) for p in mlp_params]
    return pl.pallas_call(
        _pointnet_kernel,
        out_shape=jax.ShapeDtypeStruct((n_pad, OUT_PT_FEA_DIM), out_dtype),
        grid_spec=pltpu.PrefetchScalarGridSpec(
            num_scalar_prefetch=0,
            grid=(n_pad // TN_MLP,),
            in_specs=in_specs,
            out_specs=pl.BlockSpec((TN_MLP, OUT_PT_FEA_DIM), lambda i: (i, 0))),
        compiler_params=pltpu.CompilerParams(dimension_semantics=("parallel",)),
    )(x_pad, *mlp_params)


# ------------------------- scatter-max pooling kernel --------------------------
# Flattened work-list grid: step i handles (voxel block wl_v[i], point tile
# wl_t[i]).  The work list is sorted by voxel block, so the output block stays
# resident across a block's entries and is initialized on the first one.
# tmin/tmax give each point tile's real voxel-id range; chunks of VCHUNK voxels
# that cannot overlap the tile are skipped entirely (pl.when).
def _scatter_max_kernel(wl_v_ref, wl_t_ref, tmin_ref, tmax_ref,
                        inv_ref, fea_ref, o_ref):
    i = pl.program_id(0)
    v_blk = wl_v_ref[i]
    t = wl_t_ref[i]
    prev_v = wl_v_ref[jnp.maximum(i - 1, 0)]

    @pl.when(jnp.logical_or(i == 0, prev_v != v_blk))
    def _():
        o_ref[...] = jnp.full(o_ref.shape, -jnp.inf, o_ref.dtype)

    lo = tmin_ref[t]
    hi = tmax_ref[t]
    v0 = v_blk * TV
    inv = inv_ref[...]                        # (TN_SC, 1) int32, -1 for pad rows
    fea = fea_ref[...]                        # (TN_SC, C) f32 or bf16

    for c in range(TV // VCHUNK):
        chunk_lo = v0 + c * VCHUNK
        chunk_hi = chunk_lo + (VCHUNK - 1)
        overlap = jnp.logical_and(lo <= chunk_hi, hi >= chunk_lo)

        def _reduce(c=c, chunk_lo=chunk_lo):
            rows = []
            for j in range(VCHUNK):
                hit = inv == (chunk_lo + j)                               # (TN_SC, 1)
                rows.append(jnp.max(jnp.where(hit, fea, -jnp.inf),
                                    axis=0, keepdims=True))               # (1, C)
            chunk = jnp.concatenate(rows, axis=0).astype(jnp.float32)     # (VCHUNK, C)
            s0 = c * VCHUNK
            o_ref[s0:s0 + VCHUNK, :] = jnp.maximum(o_ref[s0:s0 + VCHUNK, :], chunk)

        pl.when(overlap)(_reduce)
    # o_ref is the resident accumulator block; it is written back to HBM only
    # when the work list moves on to the next voxel block.


def scatter_max(fea_pad, inv_col, wl_v, wl_t, tmin, tmax, v_pad):
    n_work = int(wl_v.shape[0])

    def pt_map(i, wl_v_ref, wl_t_ref, tmin_ref, tmax_ref):
        return (wl_t_ref[i], 0)

    def out_map(i, wl_v_ref, wl_t_ref, tmin_ref, tmax_ref):
        return (wl_v_ref[i], 0)

    return pl.pallas_call(
        _scatter_max_kernel,
        out_shape=jax.ShapeDtypeStruct((v_pad, OUT_PT_FEA_DIM), jnp.float32),
        grid_spec=pltpu.PrefetchScalarGridSpec(
            num_scalar_prefetch=4,
            grid=(n_work,),
            in_specs=[pl.BlockSpec((TN_SC, 1), pt_map),
                      pl.BlockSpec((TN_SC, OUT_PT_FEA_DIM), pt_map)],
            out_specs=pl.BlockSpec((TV, OUT_PT_FEA_DIM), out_map)),
        compiler_params=pltpu.CompilerParams(dimension_semantics=("arbitrary",)),
    )(wl_v, wl_t, tmin, tmax, inv_col, fea_pad)


# -------------- fused local 3x3 max-pool + synthetic BEV 3x3 conv --------------
def _pool_conv_kernel(x_ref, w_ref, b_ref, o_ref):
    _, H, W, C = x_ref.shape
    Cout = o_ref.shape[3]
    He, We = H + 2, W + 2

    # Build the -inf padded image in-kernel (pad by 2): inner ring = MaxPool2d's
    # implicit -inf padding; outer ring only feeds pool centers that get zeroed.
    x = x_ref[...][0]                                                     # (H, W, C)
    pad_c = jnp.full((H, 2, C), -jnp.inf, x.dtype)
    xw = jnp.concatenate([pad_c, x, pad_c], axis=1)                       # (H, W+4, C)
    pad_r = jnp.full((2, W + 4, C), -jnp.inf, x.dtype)
    xp = jnp.concatenate([pad_r, xw, pad_r], axis=0)                      # (H+4, W+4, C)

    # 3x3 max pool (stride 1, implicit -inf padding) on the extended (H+2, W+2)
    # grid so the conv's zero padding can be applied in-place below.
    mp = xp[0:He, 0:We, :]
    for dy in range(3):
        for dx in range(3):
            if dy == 0 and dx == 0:
                continue
            mp = jnp.maximum(mp, xp[dy:dy + He, dx:dx + We, :])

    # zero the 1-px ring == Conv2d's zero padding of the pooled map
    ri = jax.lax.broadcasted_iota(jnp.int32, (He, We), 0)
    ci = jax.lax.broadcasted_iota(jnp.int32, (He, We), 1)
    interior = ((ri >= 1) & (ri <= H) & (ci >= 1) & (ci <= W))[:, :, None]
    mp = jnp.where(interior, mp, 0.0)

    # 9 accumulated (H*W, C) x (C, Cout) bf16 matmuls into one f32 accumulator
    # (no (H*W, 9C) im2col buffer -> stays inside VMEM at real BEV sizes).
    # TODO(synk): for production grid sizes, additionally tile H with a 2-row
    # halo via the BlockSpec index_map; at 16x16 the whole image fits trivially.
    acc = jnp.zeros((H * W, Cout), jnp.float32)
    for dy in range(3):
        for dx in range(3):
            tap = mp[dy:dy + H, dx:dx + W, :].reshape(H * W, C).astype(jnp.bfloat16)
            acc = acc + jnp.dot(tap, w_ref[dy * 3 + dx],
                                preferred_element_type=jnp.float32)
    o_ref[...] = (acc + b_ref[...]).reshape(1, H, W, Cout)


def bev_pool_conv(bev, w9, b_pad):  # bev: (B,H,W,C) NHWC; w9: (9, C, COUT_PAD) bf16
    B, H, W, C = bev.shape
    Cout = w9.shape[2]
    return pl.pallas_call(
        _pool_conv_kernel,
        out_shape=jax.ShapeDtypeStruct((B, H, W, Cout), jnp.float32),
        grid_spec=pltpu.PrefetchScalarGridSpec(
            num_scalar_prefetch=0,
            grid=(B,),
            in_specs=[pl.BlockSpec((1, H, W, C), lambda b: (b, 0, 0, 0)),
                      pl.BlockSpec(w9.shape, lambda b: (0, 0, 0)),
                      pl.BlockSpec(b_pad.shape, lambda b: (0, 0))],
            out_specs=pl.BlockSpec((1, H, W, Cout), lambda b: (b, 0, 0, 0))),
        compiler_params=pltpu.CompilerParams(dimension_semantics=("parallel",)),
    )(bev, w9, b_pad)


# --------------------------------- full forward --------------------------------
def ptbev_forward(pt_fea_list, xy_ind_list, params):
    B = len(pt_fea_list)
    feat_dtype = _feat_dtype()

    # concat per-batch features; prepend batch index to xy_ind (F.pad(..., (1,0), value=i))
    cat_pt_fea = jnp.concatenate(pt_fea_list, axis=0)
    cat_pt_ind = np.concatenate(
        [np.pad(np.asarray(xy), ((0, 0), (1, 0)), constant_values=i)
         for i, xy in enumerate(xy_ind_list)], axis=0).astype(np.int64)
    pt_num = cat_pt_ind.shape[0]

    # NOTE: torch.randperm shuffle is skipped — without per-voxel truncation the
    # scatter-max result is permutation invariant.
    unq, unq_inv, unq_cnt = np.unique(cat_pt_ind, axis=0,
                                      return_inverse=True, return_counts=True)
    unq_inv = unq_inv.reshape(-1)
    V = unq.shape[0]

    # TODO(synk): farthest-point-sampling subselection (numba nb_greedy_FPS +
    # multiprocessing pool) when a voxel holds > max_pt points has no clean Pallas
    # equivalent; synthetic data keeps every voxel <= max_pt so remain_ind == all True.
    assert unq_cnt.max() <= MAX_PT_PER_ENCODE

    # sort points by voxel id: each voxel's points become contiguous so every
    # voxel block only needs a small, prefetched range of point tiles.
    order = np.argsort(unq_inv, kind="stable")
    inv_sorted = unq_inv[order].astype(np.int32)
    cat_pt_fea = jnp.take(cat_pt_fea, jnp.asarray(order.astype(np.int32)), axis=0)

    # pad points; padded rows get inv = -1 so they never match a voxel
    n_pad = _round_up(pt_num, int(np.lcm(TN_MLP, TN_SC)))
    x_pad = jnp.zeros((n_pad, FEA_DIM), jnp.float32).at[:pt_num].set(cat_pt_fea)
    inv_full = np.full((n_pad,), -1, np.int32)
    inv_full[:pt_num] = inv_sorted
    inv_col = jnp.asarray(inv_full.reshape(n_pad, 1))

    # ---- host-side bookkeeping for the flattened scatter-max work list ----
    v_pad = _round_up(V, TV)
    n_vblk = v_pad // TV
    seg_start = np.concatenate([[0], np.cumsum(unq_cnt)]).astype(np.int64)
    wl_v_list, wl_t_list = [], []
    for b in range(n_vblk):
        p0 = int(seg_start[b * TV])
        p1 = int(seg_start[min((b + 1) * TV, V)])
        t_lo = p0 // TN_SC
        t_hi = max(t_lo, (p1 - 1) // TN_SC)
        for t in range(t_lo, t_hi + 1):
            wl_v_list.append(b)
            wl_t_list.append(t)
    wl_v = jnp.asarray(np.asarray(wl_v_list, np.int32))
    wl_t = jnp.asarray(np.asarray(wl_t_list, np.int32))

    # per-point-tile voxel-id ranges (gate the per-chunk reduce in the kernel)
    n_tiles = n_pad // TN_SC
    tmin = np.full((n_tiles,), np.iinfo(np.int32).max // 2, np.int32)
    tmax = np.full((n_tiles,), -1, np.int32)
    for t in range(n_tiles):
        seg = inv_full[t * TN_SC:(t + 1) * TN_SC]
        real = seg[seg >= 0]
        if real.size:
            tmin[t] = int(real.min())
            tmax[t] = int(real.max())
    tmin = jnp.asarray(tmin)
    tmax = jnp.asarray(tmax)

    # PointNet MLP (Pallas); features bf16 on v6e/v7x, f32 on v4/v5e
    processed = pointnet_mlp(x_pad, params["mlp"], feat_dtype)

    # torch_scatter.scatter_max over voxels (Pallas); drop the padded -inf rows
    pooled = scatter_max(processed, inv_col, wl_v, wl_t, tmin, tmax, v_pad)[:V]
    # fea_compre is None in this config -> pooled features used directly

    # dense scatter into the BEV grid (glue)
    out_data = jnp.zeros((B, GRID_SIZE[0], GRID_SIZE[1], OUT_PT_FEA_DIM), jnp.float32)
    unq_j = jnp.asarray(unq.astype(np.int32))
    out_data = out_data.at[unq_j[:, 0], unq_j[:, 1], unq_j[:, 2], :].set(pooled)

    # fused local 3x3 max pool + synthetic BEV_net conv (Pallas), lane-padded output
    C = OUT_PT_FEA_DIM
    w_pad = jnp.zeros((3, 3, C, COUT_PAD), jnp.float32).at[..., :N_CLASS].set(params["bev_w"])
    w9 = w_pad.reshape(9, C, COUT_PAD).astype(jnp.bfloat16)
    b_pad = jnp.zeros((1, COUT_PAD), jnp.float32).at[:, :N_CLASS].set(params["bev_b"])
    net_out = bev_pool_conv(out_data, w9, b_pad)[..., :N_CLASS]

    # voxel_fea is None -> no concatenation; back to NCHW to match PyTorch
    return jnp.transpose(net_out, (0, 3, 1, 2))


# --------------------------------- parameters ----------------------------------
def init_params(key):
    ks = jax.random.split(key, 6)

    def bn(c):
        # eval-mode BatchNorm1d, default init: gamma=1, beta=0, running (0, 1)
        gamma = jnp.ones((c,), jnp.float32)
        beta = jnp.zeros((c,), jnp.float32)
        mean = jnp.zeros((c,), jnp.float32)
        var = jnp.ones((c,), jnp.float32)
        scale = gamma / jnp.sqrt(var + BN_EPS)
        shift = beta - mean * scale
        return scale, shift

    s0, t0 = bn(FEA_DIM)
    w1 = 0.1 * jax.random.normal(ks[0], (FEA_DIM, 64), jnp.float32)
    b1 = jnp.zeros((64,), jnp.float32)
    s1, t1 = bn(64)
    w2 = 0.1 * jax.random.normal(ks[1], (64, 128), jnp.float32)
    b2 = jnp.zeros((128,), jnp.float32)
    s2, t2 = bn(128)
    w3 = 0.1 * jax.random.normal(ks[2], (128, 256), jnp.float32)
    b3 = jnp.zeros((256,), jnp.float32)
    s3, t3 = bn(256)
    w4 = 0.1 * jax.random.normal(ks[3], (256, OUT_PT_FEA_DIM), jnp.float32)
    b4 = jnp.zeros((OUT_PT_FEA_DIM,), jnp.float32)

    # fold the eval-mode BatchNorms into the adjacent Linear layers (host-side):
    #   (x*s0+t0)@W1+b1  then *s1+t1  ==  x@W1f + b1f   (then ReLU)
    w1f = (w1 * s0[:, None]) * s1[None, :]
    b1f = (t0 @ w1 + b1) * s1 + t1
    w2f = w2 * s2[None, :]
    b2f = b2 * s2 + t2
    w3f = w3 * s3[None, :]
    b3f = b3 * s3 + t3
    w4f, b4f = w4, b4

    # linear weights stored in bf16 (MXU-native input format, halves weight DMA);
    # biases stay f32, accumulation is f32.
    mlp = (w1f.astype(jnp.bfloat16), b1f.reshape(1, -1),
           w2f.astype(jnp.bfloat16), b2f.reshape(1, -1),
           w3f.astype(jnp.bfloat16), b3f.reshape(1, -1),
           w4f.astype(jnp.bfloat16), b4f.reshape(1, -1))

    bev_w = 0.1 * jax.random.normal(ks[4], (3, 3, OUT_PT_FEA_DIM, N_CLASS), jnp.float32)
    bev_b = jnp.zeros((1, N_CLASS), jnp.float32)
    return {"mlp": mlp, "bev_w": bev_w, "bev_b": bev_b}


if __name__ == "__main__":
    key = jax.random.PRNGKey(0)
    kp, kf0, kf1, ki0, ki1 = jax.random.split(key, 5)
    params = init_params(kp)

    npt = 120  # points per batch element
    pt_fea = [jax.random.normal(kf0, (npt, FEA_DIM), jnp.float32),
              jax.random.normal(kf1, (npt, FEA_DIM), jnp.float32)]
    xy_ind = [np.asarray(jax.random.randint(ki0, (npt, 2), 0, GRID_SIZE[0]), np.int32),
              np.asarray(jax.random.randint(ki1, (npt, 2), 0, GRID_SIZE[1]), np.int32)]

    out = ptbev_forward(pt_fea, xy_ind, params)
    jax.block_until_ready(out)
    assert out.shape == (2, N_CLASS, GRID_SIZE[0], GRID_SIZE[1]), out.shape
    assert bool(jnp.all(jnp.isfinite(out)))
    print("KERNEL_OK")
</pallas_src>

<mosaic_0001>
module attributes {stable_mosaic.version = 11 : i64} {
  func.func @_pointnet_kernel(%arg0: i32, %arg1: memref<512x3xf32, #tpu.memory_space<vmem>>, %arg2: memref<3x64xbf16, #tpu.memory_space<vmem>>, %arg3: memref<1x64xf32, #tpu.memory_space<vmem>>, %arg4: memref<64x128xbf16, #tpu.memory_space<vmem>>, %arg5: memref<1x128xf32, #tpu.memory_space<vmem>>, %arg6: memref<128x256xbf16, #tpu.memory_space<vmem>>, %arg7: memref<1x256xf32, #tpu.memory_space<vmem>>, %arg8: memref<256x64xbf16, #tpu.memory_space<vmem>>, %arg9: memref<1x64xf32, #tpu.memory_space<vmem>>, %arg10: memref<512x64xf32, #tpu.memory_space<vmem>>) attributes {dimension_semantics = [#tpu.dimension_semantics<parallel>], iteration_bounds = array<i64: 1>, scalar_prefetch = 0 : i64, scratch_operands = 0 : i64, tpu.core_type = #tpu.core_type<tc>, window_params = [{transform_indices = @transform_0, window_bounds = array<i64: 512, 3>}, {pipeline_mode = #tpu.pipeline_mode<synchronous>, transform_indices = @transform_1, window_bounds = array<i64: 3, 64>}, {pipeline_mode = #tpu.pipeline_mode<synchronous>, transform_indices = @transform_2, window_bounds = array<i64: 1, 64>}, {pipeline_mode = #tpu.pipeline_mode<synchronous>, transform_indices = @transform_3, window_bounds = array<i64: 64, 128>}, {pipeline_mode = #tpu.pipeline_mode<synchronous>, transform_indices = @transform_4, window_bounds = array<i64: 1, 128>}, {pipeline_mode = #tpu.pipeline_mode<synchronous>, transform_indices = @transform_5, window_bounds = array<i64: 128, 256>}, {pipeline_mode = #tpu.pipeline_mode<synchronous>, transform_indices = @transform_6, window_bounds = array<i64: 1, 256>}, {pipeline_mode = #tpu.pipeline_mode<synchronous>, transform_indices = @transform_7, window_bounds = array<i64: 256, 64>}, {pipeline_mode = #tpu.pipeline_mode<synchronous>, transform_indices = @transform_8, window_bounds = array<i64: 1, 64>}, {transform_indices = @transform_9, window_bounds = array<i64: 512, 64>}]} {
    %c0 = arith.constant 0 : index
    %c0_0 = arith.constant 0 : index
    %0 = vector.load %arg1[%c0, %c0_0] : memref<512x3xf32, #tpu.memory_space<vmem>>, vector<512x3xf32>
    %1 = arith.truncf %0 : vector<512x3xf32> to vector<512x3xbf16>
    %c0_1 = arith.constant 0 : index
    %c0_2 = arith.constant 0 : index
    %2 = vector.load %arg2[%c0_1, %c0_2] : memref<3x64xbf16, #tpu.memory_space<vmem>>, vector<3x64xbf16>
    %cst = arith.constant dense<0.000000e+00> : vector<512x64xf32>
    %3 = tpu.matmul %1, %2, %cst {dimension_numbers = #tpu.dot_dimension_numbers<[1], [0], [0], [1], [0, 0, 1, 1], [], []>} : vector<512x3xbf16>, vector<3x64xbf16>, vector<512x64xf32> -> vector<512x64xf32>
    %c0_3 = arith.constant 0 : index
    %c0_4 = arith.constant 0 : index
    %4 = vector.load %arg3[%c0_3, %c0_4] : memref<1x64xf32, #tpu.memory_space<vmem>>, vector<1x64xf32>
    %5 = vector.broadcast %4 : vector<1x64xf32> to vector<512x64xf32>
    %6 = arith.addf %3, %5 : vector<512x64xf32>
    %cst_5 = arith.constant 0.000000e+00 : f32
    %7 = vector.broadcast %cst_5 : f32 to vector<512x64xf32>
    %8 = arith.maximumf %6, %7 : vector<512x64xf32>
    %9 = arith.truncf %8 : vector<512x64xf32> to vector<512x64xbf16>
    %c0_6 = arith.constant 0 : index
    %c0_7 = arith.constant 0 : index
    %10 = vector.load %arg4[%c0_6, %c0_7] : memref<64x128xbf16, #tpu.memory_space<vmem>>, vector<64x128xbf16>
    %cst_8 = arith.constant dense<0.000000e+00> : vector<512x128xf32>
    %11 = tpu.matmul %9, %10, %cst_8 {dimension_numbers = #tpu.dot_dimension_numbers<[1], [0], [0], [1], [0, 0, 1, 1], [], []>} : vector<512x64xbf16>, vector<64x128xbf16>, vector<512x128xf32> -> vector<512x128xf32>
    %c0_9 = arith.constant 0 : index
    %c0_10 = arith.constant 0 : index
    %12 = vector.load %arg5[%c0_9, %c0_10] : memref<1x128xf32, #tpu.memory_space<vmem>>, vector<1x128xf32>
    %13 = vector.broadcast %12 : vector<1x128xf32> to vector<512x128xf32>
    %14 = arith.addf %11, %13 : vector<512x128xf32>
    %cst_11 = arith.constant 0.000000e+00 : f32
    %15 = vector.broadcast %cst_11 : f32 to vector<512x128xf32>
    %16 = arith.maximumf %14, %15 : vector<512x128xf32>
    %17 = arith.truncf %16 : vector<512x128xf32> to vector<512x128xbf16>
    %c0_12 = arith.constant 0 : index
    %c0_13 = arith.constant 0 : index
    %18 = vector.load %arg6[%c0_12, %c0_13] : memref<128x256xbf16, #tpu.memory_space<vmem>>, vector<128x256xbf16>
    %cst_14 = arith.constant dense<0.000000e+00> : vector<512x256xf32>
    %19 = tpu.matmul %17, %18, %cst_14 {dimension_numbers = #tpu.dot_dimension_numbers<[1], [0], [0], [1], [0, 0, 1, 1], [], []>} : vector<512x128xbf16>, vector<128x256xbf16>, vector<512x256xf32> -> vector<512x256xf32>
    %c0_15 = arith.constant 0 : index
    %c0_16 = arith.constant 0 : index
    %20 = vector.load %arg7[%c0_15, %c0_16] : memref<1x256xf32, #tpu.memory_space<vmem>>, vector<1x256xf32>
    %21 = vector.broadcast %20 : vector<1x256xf32> to vector<512x256xf32>
    %22 = arith.addf %19, %21 : vector<512x256xf32>
    %cst_17 = arith.constant 0.000000e+00 : f32
    %23 = vector.broadcast %cst_17 : f32 to vector<512x256xf32>
    %24 = arith.maximumf %22, %23 : vector<512x256xf32>
    %25 = arith.truncf %24 : vector<512x256xf32> to vector<512x256xbf16>
    %c0_18 = arith.constant 0 : index
    %c0_19 = arith.constant 0 : index
    %26 = vector.load %arg8[%c0_18, %c0_19] : memref<256x64xbf16, #tpu.memory_space<vmem>>, vector<256x64xbf16>
    %cst_20 = arith.constant dense<0.000000e+00> : vector<512x64xf32>
    %27 = tpu.matmul %25, %26, %cst_20 {dimension_numbers = #tpu.dot_dimension_numbers<[1], [0], [0], [1], [0, 0, 1, 1], [], []>} : vector<512x256xbf16>, vector<256x64xbf16>, vector<512x64xf32> -> vector<512x64xf32>
    %c0_21 = arith.constant 0 : index
    %c0_22 = arith.constant 0 : index
    %28 = vector.load %arg9[%c0_21, %c0_22] : memref<1x64xf32, #tpu.memory_space<vmem>>, vector<1x64xf32>
    %29 = vector.broadcast %28 : vector<1x64xf32> to vector<512x64xf32>
    %30 = arith.addf %27, %29 : vector<512x64xf32>
    %c0_23 = arith.constant 0 : index
    %c0_24 = arith.constant 0 : index
    %31 = vector.load %arg10[%c0_23, %c0_24] : memref<512x64xf32, #tpu.memory_space<vmem>>, vector<512x64xf32>
    tpu.vector_store %arg10[%c0_23, %c0_24], %30 {strides = array<i32>} : memref<512x64xf32, #tpu.memory_space<vmem>>, vector<512x64xf32>,
    return
  }
  func.func @transform_0(%arg0: i32) -> (i32, i32) {
    %c0_i32 = arith.constant 0 : i32
    %c0_i32_0 = arith.constant 0 : i32
    return %arg0, %c0_i32 : i32, i32
  }
  func.func @transform_1(%arg0: i32) -> (i32, i32) {
    %c0_i32 = arith.constant 0 : i32
    %c0_i32_0 = arith.constant 0 : i32
    %c0_i32_1 = arith.constant 0 : i32
    return %c0_i32, %c0_i32_0 : i32, i32
  }
  func.func @transform_2(%arg0: i32) -> (i32, i32) {
    %c0_i32 = arith.constant 0 : i32
    %c0_i32_0 = arith.constant 0 : i32
    %c0_i32_1 = arith.constant 0 : i32
    return %c0_i32, %c0_i32_0 : i32, i32
  }
  func.func @transform_3(%arg0: i32) -> (i32, i32) {
    %c0_i32 = arith.constant 0 : i32
    %c0_i32_0 = arith.constant 0 : i32
    %c0_i32_1 = arith.constant 0 : i32
    return %c0_i32, %c0_i32_0 : i32, i32
  }
  func.func @transform_4(%arg0: i32) -> (i32, i32) {
    %c0_i32 = arith.constant 0 : i32
    %c0_i32_0 = arith.constant 0 : i32
    %c0_i32_1 = arith.constant 0 : i32
    return %c0_i32, %c0_i32_0 : i32, i32
  }
  func.func @transform_5(%arg0: i32) -> (i32, i32) {
    %c0_i32 = arith.constant 0 : i32
    %c0_i32_0 = arith.constant 0 : i32
    %c0_i32_1 = arith.constant 0 : i32
    return %c0_i32, %c0_i32_0 : i32, i32
  }
  func.func @transform_6(%arg0: i32) -> (i32, i32) {
    %c0_i32 = arith.constant 0 : i32
    %c0_i32_0 = arith.constant 0 : i32
    %c0_i32_1 = arith.constant 0 : i32
    return %c0_i32, %c0_i32_0 : i32, i32
  }
  func.func @transform_7(%arg0: i32) -> (i32, i32) {
    %c0_i32 = arith.constant 0 : i32
    %c0_i32_0 = arith.constant 0 : i32
    %c0_i32_1 = arith.constant 0 : i32
    return %c0_i32, %c0_i32_0 : i32, i32
  }
  func.func @transform_8(%arg0: i32) -> (i32, i32) {
    %c0_i32 = arith.constant 0 : i32
    %c0_i32_0 = arith.constant 0 : i32
    %c0_i32_1 = arith.constant 0 : i32
    return %c0_i32, %c0_i32_0 : i32, i32
  }
  func.func @transform_9(%arg0: i32) -> (i32, i32) {
    %c0_i32 = arith.constant 0 : i32
    %c0_i32_0 = arith.constant 0 : i32
    return %arg0, %c0_i32 : i32, i32
  }
}

</mosaic_0001>

<llo_original>
// kernel: tpu_custom_call.1
$region0: #{tpu_custom_call.1}
  #allocation0 [shape = 'u32[]', space=smem, size = 0x4, offset = 0x4, fixed_abs, tag = 'smem constant byte address 0x4 - core index']
  #allocation1 [shape = 'u32[72,128]{1,0:T(1,128)}', space=vmem, size = 0x9000, scoped, tag = 'internal scratch']
  %s0 = inlined_call_operand.vmem [shape: f32[512,3], index: 0, kind: input, shape index: {}]
  %s1 = inlined_call_operand.vmem [shape: bf16[3,64], index: 1, kind: input, shape index: {}]
  %s2 = inlined_call_operand.vmem [shape: f32[1,64], index: 2, kind: input, shape index: {}]
  %s3 = inlined_call_operand.vmem [shape: bf16[64,128], index: 3, kind: input, shape index: {}]
  %s4 = inlined_call_operand.vmem [shape: f32[1,128], index: 4, kind: input, shape index: {}]
  %s5 = inlined_call_operand.vmem [shape: bf16[128,256], index: 5, kind: input, shape index: {}]
  %s6 = inlined_call_operand.vmem [shape: f32[1,256], index: 6, kind: input, shape index: {}]
  %s7 = inlined_call_operand.vmem [shape: bf16[256,64], index: 7, kind: input, shape index: {}]
  %s8 = inlined_call_operand.vmem [shape: f32[1,64], index: 8, kind: input, shape index: {}]
  %s9 = inlined_call_operand.vmem [shape: f32[512,64], index: 9, kind: output, shape index: {}]
  %s10 = sld [smem:[#allocation0]]
  $region46: #{tpu_custom_call.1} parent=0
    _
  %s12 = ssub.s32 1, %s10
  %s13 = scalar_select 0, %s12, %s10
  // Predicated region
  $region2: #{tpu_custom_call.1} parent=0 // pred_check
    _
  $region3: #{tpu_custom_call.1} parent=0 // pred_check_branch
    %15 = sbr.rel (0) target = $region5
  $region4: #{tpu_custom_call.1} parent=0 // pred_region
    _
  $region5: #{tpu_custom_call.1} parent=0 // pred_fallthru
    _
  // Predicated region
  $region6: #{tpu_custom_call.1} parent=0 // pred_check
    _
  $region7: #{tpu_custom_call.1} parent=0 // pred_check_branch
    %17 = sbr.rel (0) target = $region9
  $region8: #{tpu_custom_call.1} parent=0 // pred_region
    _
  $region9: #{tpu_custom_call.1} parent=0 // pred_fallthru
    _
  // Predicated region
  $region10: #{tpu_custom_call.1} parent=0 // pred_check
    _
  $region11: #{tpu_custom_call.1} parent=0 // pred_check_branch
    %19 = sbr.rel (0) target = $region13
  $region12: #{tpu_custom_call.1} parent=0 // pred_region
    _
  $region13: #{tpu_custom_call.1} parent=0 // pred_fallthru
    _
  // Predicated region
  $region14: #{tpu_custom_call.1} parent=0 // pred_check
    _
  $region15: #{tpu_custom_call.1} parent=0 // pred_check_branch
    %21 = sbr.rel (0) target = $region17
  $region16: #{tpu_custom_call.1} parent=0 // pred_region
    _
  $region17: #{tpu_custom_call.1} parent=0 // pred_fallthru
    _
  // Predicated region
  $region18: #{tpu_custom_call.1} parent=0 // pred_check
    _
  $region19: #{tpu_custom_call.1} parent=0 // pred_check_branch
    %23 = sbr.rel (0) target = $region21
  $region20: #{tpu_custom_call.1} parent=0 // pred_region
    _
  $region21: #{tpu_custom_call.1} parent=0 // pred_fallthru
    _
  // Predicated region
  $region22: #{tpu_custom_call.1} parent=0 // pred_check
    _
  $region23: #{tpu_custom_call.1} parent=0 // pred_check_branch
    %25 = sbr.rel (0) target = $region25
  $region24: #{tpu_custom_call.1} parent=0 // pred_region
    _
  $region25: #{tpu_custom_call.1} parent=0 // pred_fallthru
    _
  // Predicated region
  $region26: #{tpu_custom_call.1} parent=0 // pred_check
    _
  $region27: #{tpu_custom_call.1} parent=0 // pred_check_branch
    %27 = sbr.rel (0) target = $region29
  $region28: #{tpu_custom_call.1} parent=0 // pred_region
    _
  $region29: #{tpu_custom_call.1} parent=0 // pred_fallthru
    _
  // Predicated region
  $region30: #{tpu_custom_call.1} parent=0 // pred_check
    _
  $region31: #{tpu_custom_call.1} parent=0 // pred_check_branch
    %29 = sbr.rel (0) target = $region33
  $region32: #{tpu_custom_call.1} parent=0 // pred_region
    _
  $region33: #{tpu_custom_call.1} parent=0 // pred_fallthru
    _
  // Predicated region
  $region34: #{tpu_custom_call.1} parent=0 // pred_check
    _
  $region35: #{tpu_custom_call.1} parent=0 // pred_check_branch
    %31 = sbr.rel (0) target = $region37
  $region36: #{tpu_custom_call.1} parent=0 // pred_region
    _
  $region37: #{tpu_custom_call.1} parent=0 // pred_fallthru
    _
  %v33 = vld [vmem:[%s0] sm:$0xff]
  %v34 = vld [vmem:[%s0 + $0x8] sm:$0xff]
  %v35 = vld [vmem:[%s0 + $0x10] sm:$0xff]
  %v36 = vld [vmem:[%s0 + $0x18] sm:$0xff]
  %v37 = vld [vmem:[%s0 + $0x20] sm:$0xff]
  %v38 = vld [vmem:[%s0 + $0x28] sm:$0xff]
  %v39 = vld [vmem:[%s0 + $0x30] sm:$0xff]
  %v40 = vld [vmem:[%s0 + $0x38] sm:$0xff]
  %v41 = vld [vmem:[%s0 + $0x40] sm:$0xff]
  %v42 = vld [vmem:[%s0 + $0x48] sm:$0xff]
  %v43 = vld [vmem:[%s0 + $0x50] sm:$0xff]
  %v44 = vld [vmem:[%s0 + $0x58] sm:$0xff]
  %v45 = vld [vmem:[%s0 + $0x60] sm:$0xff]
  %v46 = vld [vmem:[%s0 + $0x68] sm:$0xff]
  %v47 = vld [vmem:[%s0 + $0x70] sm:$0xff]
  %v48 = vld [vmem:[%s0 + $0x78] sm:$0xff]
  %v49 = vld [vmem:[%s0 + $0x80] sm:$0xff]
  %v50 = vld [vmem:[%s0 + $0x88] sm:$0xff]
  %v51 = vld [vmem:[%s0 + $0x90] sm:$0xff]
  %v52 = vld [vmem:[%s0 + $0x98] sm:$0xff]
  %v53 = vld [vmem:[%s0 + $0xa0] sm:$0xff]
  %v54 = vld [vmem:[%s0 + $0xa8] sm:$0xff]
  %v55 = vld [vmem:[%s0 + $0xb0] sm:$0xff]
  %v56 = vld [vmem:[%s0 + $0xb8] sm:$0xff]
  %v57 = vld [vmem:[%s0 + $0xc0] sm:$0xff]
  %v58 = vld [vmem:[%s0 + $0xc8] sm:$0xff]
  %v59 = vld [vmem:[%s0 + $0xd0] sm:$0xff]
  %v60 = vld [vmem:[%s0 + $0xd8] sm:$0xff]
  %v61 = vld [vmem:[%s0 + $0xe0] sm:$0xff]
  %v62 = vld [vmem:[%s0 + $0xe8] sm:$0xff]
  %v63 = vld [vmem:[%s0 + $0xf0] sm:$0xff]
  %v64 = vld [vmem:[%s0 + $0xf8] sm:$0xff]
  %v65 = vld [vmem:[%s0 + $0x100] sm:$0xff]
  %v66 = vld [vmem:[%s0 + $0x108] sm:$0xff]
  %v67 = vld [vmem:[%s0 + $0x110] sm:$0xff]
  %v68 = vld [vmem:[%s0 + $0x118] sm:$0xff]
  %v69 = vld [vmem:[%s0 + $0x120] sm:$0xff]
  %v70 = vld [vmem:[%s0 + $0x128] sm:$0xff]
  %v71 = vld [vmem:[%s0 + $0x130] sm:$0xff]
  %v72 = vld [vmem:[%s0 + $0x138] sm:$0xff]
  %v73 = vld [vmem:[%s0 + $0x140] sm:$0xff]
  %v74 = vld [vmem:[%s0 + $0x148] sm:$0xff]
  %v75 = vld [vmem:[%s0 + $0x150] sm:$0xff]
  %v76 = vld [vmem:[%s0 + $0x158] sm:$0xff]
  %v77 = vld [vmem:[%s0 + $0x160] sm:$0xff]
  %v78 = vld [vmem:[%s0 + $0x168] sm:$0xff]
  %v79 = vld [vmem:[%s0 + $0x170] sm:$0xff]
  %v80 = vld [vmem:[%s0 + $0x178] sm:$0xff]
  %v81 = vld [vmem:[%s0 + $0x180] sm:$0xff]
  %v82 = vld [vmem:[%s0 + $0x188] sm:$0xff]
  %v83 = vld [vmem:[%s0 + $0x190] sm:$0xff]
  %v84 = vld [vmem:[%s0 + $0x198] sm:$0xff]
  %v85 = vld [vmem:[%s0 + $0x1a0] sm:$0xff]
  %v86 = vld [vmem:[%s0 + $0x1a8] sm:$0xff]
  %v87 = vld [vmem:[%s0 + $0x1b0] sm:$0xff]
  %v88 = vld [vmem:[%s0 + $0x1b8] sm:$0xff]
  %v89 = vld [vmem:[%s0 + $0x1c0] sm:$0xff]
  %v90 = vld [vmem:[%s0 + $0x1c8] sm:$0xff]
  %v91 = vld [vmem:[%s0 + $0x1d0] sm:$0xff]
  %v92 = vld [vmem:[%s0 + $0x1d8] sm:$0xff]
  %v93 = vld [vmem:[%s0 + $0x1e0] sm:$0xff]
  %v94 = vld [vmem:[%s0 + $0x1e8] sm:$0xff]
  %v95 = vld [vmem:[%s0 + $0x1f0] sm:$0xff]
  %v96 = vld [vmem:[%s0 + $0x1f8] sm:$0xff]
  %v97 = vpack.c.bf16 %v34, %v33
  %v98 = vpack.c.bf16 %v36, %v35
  %v99 = vpack.c.bf16 %v38, %v37
  %v100 = vpack.c.bf16 %v40, %v39
  %v101 = vpack.c.bf16 %v42, %v41
  %v102 = vpack.c.bf16 %v44, %v43
  %v103 = vpack.c.bf16 %v46, %v45
  %v104 = vpack.c.bf16 %v48, %v47
  %v105 = vpack.c.bf16 %v50, %v49
  %v106 = vpack.c.bf16 %v52, %v51
  %v107 = vpack.c.bf16 %v54, %v53
  %v108 = vpack.c.bf16 %v56, %v55
  %v109 = vpack.c.bf16 %v58, %v57
  %v110 = vpack.c.bf16 %v60, %v59
  %v111 = vpack.c.bf16 %v62, %v61
  %v112 = vpack.c.bf16 %v64, %v63
  %v113 = vpack.c.bf16 %v66, %v65
  %v114 = vpack.c.bf16 %v68, %v67
  %v115 = vpack.c.bf16 %v70, %v69
  %v116 = vpack.c.bf16 %v72, %v71
  %v117 = vpack.c.bf16 %v74, %v73
  %v118 = vpack.c.bf16 %v76, %v75
  %v119 = vpack.c.bf16 %v78, %v77
  %v120 = vpack.c.bf16 %v80, %v79
  %v121 = vpack.c.bf16 %v82, %v81
  %v122 = vpack.c.bf16 %v84, %v83
  %v123 = vpack.c.bf16 %v86, %v85
  %v124 = vpack.c.bf16 %v88, %v87
  %v125 = vpack.c.bf16 %v90, %v89
  %v126 = vpack.c.bf16 %v92, %v91
  %v127 = vpack.c.bf16 %v94, %v93
  %v128 = vpack.c.bf16 %v96, %v95
  %v129 = vld [vmem:[%s1] sm:$0x3]
  %v130 = vld [vmem:[%s2] sm:$0x1]
  %v132 = vperm.slane %v130, 0
  %vm134 = vcmask 23552
  %v136 = vsel %vm134, %v97, 0
  %v139 = vsel %vm134, %v98, 0
  %v142 = vsel %vm134, %v99, 0
  %v145 = vsel %vm134, %v100, 0
  %v148 = vsel %vm134, %v101, 0
  %v151 = vsel %vm134, %v102, 0
  %v154 = vsel %vm134, %v103, 0
  %v157 = vsel %vm134, %v104, 0
  %v160 = vsel %vm134, %v105, 0
  %v163 = vsel %vm134, %v106, 0
  %v166 = vsel %vm134, %v107, 0
  %v169 = vsel %vm134, %v108, 0
  %v172 = vsel %vm134, %v109, 0
  %v175 = vsel %vm134, %v110, 0
  %v178 = vsel %vm134, %v111, 0
  %v181 = vsel %vm134, %v112, 0
  %v184 = vsel %vm134, %v113, 0
  %v187 = vsel %vm134, %v114, 0
  %v190 = vsel %vm134, %v115, 0
  %v193 = vsel %vm134, %v116, 0
  %v196 = vsel %vm134, %v117, 0
  %v199 = vsel %vm134, %v118, 0
  %v202 = vsel %vm134, %v119, 0
  %v205 = vsel %vm134, %v120, 0
  %v208 = vsel %vm134, %v121, 0
  %v211 = vsel %vm134, %v122, 0
  %v214 = vsel %vm134, %v123, 0
  %v217 = vsel %vm134, %v124, 0
  %v220 = vsel %vm134, %v125, 0
  %v223 = vsel %vm134, %v126, 0
  %v226 = vsel %vm134, %v127, 0
  %v229 = vsel %vm134, %v128, 0
  %vm231 = vcmask 1040384
  %vm232 = vcmask 1041408
  %v233 = vsel %vm231, 4294967295, 65535
  %v234 = vsel %vm232, %v233, 0
  %v236 = vand.u32 %v129, %v234
  %238 = vmatpush.bf16.msra.mxu0 0
  %239 = vmatpush.bf16.msra.mxu0 0
  %240 = vmatpush.bf16.msra.mxu0 0
  %241 = vmatpush.bf16.msra.mxu0 0
  %242 = vmatpush.bf16.msra.mxu0 0
  %243 = vmatpush.bf16.msra.mxu0 0
  %244 = vmatpush.bf16.msra.mxu0 0
  %245 = vmatpush.bf16.msra.mxu0 %v236
  %246 = vmatmul.bf16.gmra.mxu0 %v136
  %v247 = vpop.f32.mrf.mxu0
  %v248 = vadd.f32 %v132, %v247
  %v249 = vpop.f32.mrf.mxu0
  %v250 = vadd.f32 %v132, %v249
  %251 = vmatmul.bf16.gmra.mxu0 %v139
  %v252 = vpop.f32.mrf.mxu0
  %v253 = vadd.f32 %v132, %v252
  %v254 = vpop.f32.mrf.mxu0
  %v255 = vadd.f32 %v132, %v254
  %256 = vmatmul.bf16.gmra.mxu0 %v142
  %v257 = vpop.f32.mrf.mxu0
  %v258 = vadd.f32 %v132, %v257
  %v259 = vpop.f32.mrf.mxu0
  %v260 = vadd.f32 %v132, %v259
  %261 = vmatmul.bf16.gmra.mxu0 %v145
  %v262 = vpop.f32.mrf.mxu0
  %v263 = vadd.f32 %v132, %v262
  %v264 = vpop.f32.mrf.mxu0
  %v265 = vadd.f32 %v132, %v264
  %266 = vmatmul.bf16.gmra.mxu0 %v148
  %v267 = vpop.f32.mrf.mxu0
  %v268 = vadd.f32 %v132, %v267
  %v269 = vpop.f32.mrf.mxu0
  %v270 = vadd.f32 %v132, %v269
  %271 = vmatmul.bf16.gmra.mxu0 %v151
  %v272 = vpop.f32.mrf.mxu0
  %v273 = vadd.f32 %v132, %v272
  %v274 = vpop.f32.mrf.mxu0
  %v275 = vadd.f32 %v132, %v274
  %276 = vmatmul.bf16.gmra.mxu0 %v154
  %v277 = vpop.f32.mrf.mxu0
  %v278 = vadd.f32 %v132, %v277
  %v279 = vpop.f32.mrf.mxu0
  %v280 = vadd.f32 %v132, %v279
  %281 = vmatmul.bf16.gmra.mxu0 %v157
  %v282 = vpop.f32.mrf.mxu0
  %v283 = vadd.f32 %v132, %v282
  %v284 = vpop.f32.mrf.mxu0
  %v285 = vadd.f32 %v132, %v284
  %286 = vmatmul.bf16.gmra.mxu0 %v160
  %v287 = vpop.f32.mrf.mxu0
  %v288 = vadd.f32 %v132, %v287
  %v289 = vpop.f32.mrf.mxu0
  %v290 = vadd.f32 %v132, %v289
  %291 = vmatmul.bf16.gmra.mxu0 %v163
  %v292 = vpop.f32.mrf.mxu0
  %v293 = vadd.f32 %v132, %v292
  %v294 = vpop.f32.mrf.mxu0
  %v295 = vadd.f32 %v132, %v294
  %296 = vmatmul.bf16.gmra.mxu0 %v166
  %v297 = vpop.f32.mrf.mxu0
  %v298 = vadd.f32 %v132, %v297
  %v299 = vpop.f32.mrf.mxu0
  %v300 = vadd.f32 %v132, %v299
  %301 = vmatmul.bf16.gmra.mxu0 %v169
  %v302 = vpop.f32.mrf.mxu0
  %v303 = vadd.f32 %v132, %v302
  %v304 = vpop.f32.mrf.mxu0
  %v305 = vadd.f32 %v132, %v304
  %306 = vmatmul.bf16.gmra.mxu0 %v172
  %v307 = vpop.f32.mrf.mxu0
  %v308 = vadd.f32 %v132, %v307
  %v309 = vpop.f32.mrf.mxu0
  %v310 = vadd.f32 %v132, %v309
  %311 = vmatmul.bf16.gmra.mxu0 %v175
  %v312 = vpop.f32.mrf.mxu0
  %v313 = vadd.f32 %v132, %v312
  %v314 = vpop.f32.mrf.mxu0
  %v315 = vadd.f32 %v132, %v314
  %316 = vmatmul.bf16.gmra.mxu0 %v178
  %v317 = vpop.f32.mrf.mxu0
  %v318 = vadd.f32 %v132, %v317
  %v319 = vpop.f32.mrf.mxu0
  %v320 = vadd.f32 %v132, %v319
  %321 = vmatmul.bf16.gmra.mxu0 %v181
  %v322 = vpop.f32.mrf.mxu0
  %v323 = vadd.f32 %v132, %v322
  %v324 = vpop.f32.mrf.mxu0
  %v325 = vadd.f32 %v132, %v324
  %326 = vmatmul.bf16.gmra.mxu0 %v184
  %v327 = vpop.f32.mrf.mxu0
  %v328 = vadd.f32 %v132, %v327
  %v329 = vpop.f32.mrf.mxu0
  %v330 = vadd.f32 %v132, %v329
  %331 = vmatmul.bf16.gmra.mxu0 %v187
  %v332 = vpop.f32.mrf.mxu0
  %v333 = vadd.f32 %v132, %v332
  %v334 = vpop.f32.mrf.mxu0
  %v335 = vadd.f32 %v132, %v334
  %336 = vmatmul.bf16.gmra.mxu0 %v190
  %v337 = vpop.f32.mrf.mxu0
  %v338 = vadd.f32 %v132, %v337
  %v339 = vpop.f32.mrf.mxu0
  %v340 = vadd.f32 %v132, %v339
  %341 = vmatmul.bf16.gmra.mxu0 %v193
  %v342 = vpop.f32.mrf.mxu0
  %v343 = vadd.f32 %v132, %v342
  %v344 = vpop.f32.mrf.mxu0
  %v345 = vadd.f32 %v132, %v344
  %346 = vmatmul.bf16.gmra.mxu0 %v196
  %v347 = vpop.f32.mrf.mxu0
  %v348 = vadd.f32 %v132, %v347
  %v349 = vpop.f32.mrf.mxu0
  %v350 = vadd.f32 %v132, %v349
  %351 = vmatmul.bf16.gmra.mxu0 %v199
  %v352 = vpop.f32.mrf.mxu0
  %v353 = vadd.f32 %v132, %v352
  %v354 = vpop.f32.mrf.mxu0
  %v355 = vadd.f32 %v132, %v354
  %356 = vmatmul.bf16.gmra.mxu0 %v202
  %v357 = vpop.f32.mrf.mxu0
  %v358 = vadd.f32 %v132, %v357
  %v359 = vpop.f32.mrf.mxu0
  %v360 = vadd.f32 %v132, %v359
  %361 = vmatmul.bf16.gmra.mxu0 %v205
  %v362 = vpop.f32.mrf.mxu0
  %v363 = vadd.f32 %v132, %v362
  %v364 = vpop.f32.mrf.mxu0
  %v365 = vadd.f32 %v132, %v364
  %366 = vmatmul.bf16.gmra.mxu0 %v208
  %v367 = vpop.f32.mrf.mxu0
  %v368 = vadd.f32 %v132, %v367
  %v369 = vpop.f32.mrf.mxu0
  %v370 = vadd.f32 %v132, %v369
  %371 = vmatmul.bf16.gmra.mxu0 %v211
  %v372 = vpop.f32.mrf.mxu0
  %v373 = vadd.f32 %v132, %v372
  %v374 = vpop.f32.mrf.mxu0
  %v375 = vadd.f32 %v132, %v374
  %376 = vmatmul.bf16.gmra.mxu0 %v214
  %v377 = vpop.f32.mrf.mxu0
  %v378 = vadd.f32 %v132, %v377
  %v379 = vpop.f32.mrf.mxu0
  %v380 = vadd.f32 %v132, %v379
  %381 = vmatmul.bf16.gmra.mxu0 %v217
  %v382 = vpop.f32.mrf.mxu0
  %v383 = vadd.f32 %v132, %v382
  %v384 = vpop.f32.mrf.mxu0
  %v385 = vadd.f32 %v132, %v384
  %386 = vmatmul.bf16.gmra.mxu0 %v220
  %v387 = vpop.f32.mrf.mxu0
  %v388 = vadd.f32 %v132, %v387
  %v389 = vpop.f32.mrf.mxu0
  %v390 = vadd.f32 %v132, %v389
  %391 = vmatmul.bf16.gmra.mxu0 %v223
  %v392 = vpop.f32.mrf.mxu0
  %v393 = vadd.f32 %v132, %v392
  %v394 = vpop.f32.mrf.mxu0
  %v395 = vadd.f32 %v132, %v394
  %396 = vmatmul.bf16.gmra.mxu0 %v226
  %v397 = vpop.f32.mrf.mxu0
  %v398 = vadd.f32 %v132, %v397
  %v399 = vpop.f32.mrf.mxu0
  %v400 = vadd.f32 %v132, %v399
  %401 = vmatmul.bf16.gmra.mxu0 %v229
  %v402 = vpop.f32.mrf.mxu0
  %v403 = vadd.f32 %v132, %v402
  %v404 = vpop.f32.mrf.mxu0
  %v405 = vadd.f32 %v132, %v404
  %406 = vdwg.mxu0
  %v407 = vmax.f32 %v248, 0.0
  %v408 = vmax.f32 %v250, 0.0
  %v409 = vmax.f32 %v253, 0.0
  %v410 = vmax.f32 %v255, 0.0
  %v411 = vmax.f32 %v258, 0.0
  %v412 = vmax.f32 %v260, 0.0
  %v413 = vmax.f32 %v263, 0.0
  %v414 = vmax.f32 %v265, 0.0
  %v415 = vmax.f32 %v268, 0.0
  %v416 = vmax.f32 %v270, 0.0
  %v417 = vmax.f32 %v273, 0.0
  %v418 = vmax.f32 %v275, 0.0
  %v419 = vmax.f32 %v278, 0.0
  %v420 = vmax.f32 %v280, 0.0
  %v421 = vmax.f32 %v283, 0.0
  %v422 = vmax.f32 %v285, 0.0
  %v423 = vmax.f32 %v288, 0.0
  %v424 = vmax.f32 %v290, 0.0
  %v425 = vmax.f32 %v293, 0.0
  %v426 = vmax.f32 %v295, 0.0
  %v427 = vmax.f32 %v298, 0.0
  %v428 = vmax.f32 %v300, 0.0
  %v429 = vmax.f32 %v303, 0.0
  %v430 = vmax.f32 %v305, 0.0
  %v431 = vmax.f32 %v308, 0.0
  %v432 = vmax.f32 %v310, 0.0
  %v433 = vmax.f32 %v313, 0.0
  %v434 = vmax.f32 %v315, 0.0
  %v435 = vmax.f32 %v318, 0.0
  %v436 = vmax.f32 %v320, 0.0
  %v437 = vmax.f32 %v323, 0.0
  %v438 = vmax.f32 %v325, 0.0
  %v439 = vmax.f32 %v328, 0.0
  %v440 = vmax.f32 %v330, 0.0
  %v441 = vmax.f32 %v333, 0.0
  %v442 = vmax.f32 %v335, 0.0
  %v443 = vmax.f32 %v338, 0.0
  %v444 = vmax.f32 %v340, 0.0
  %v445 = vmax.f32 %v343, 0.0
  %v446 = vmax.f32 %v345, 0.0
  %v447 = vmax.f32 %v348, 0.0
  %v448 = vmax.f32 %v350, 0.0
  %v449 = vmax.f32 %v353, 0.0
  %v450 = vmax.f32 %v355, 0.0
  %v451 = vmax.f32 %v358, 0.0
  %v452 = vmax.f32 %v360, 0.0
  %v453 = vmax.f32 %v363, 0.0
  %v454 = vmax.f32 %v365, 0.0
  %v455 = vmax.f32 %v368, 0.0
  %v456 = vmax.f32 %v370, 0.0
  %v457 = vmax.f32 %v373, 0.0
  %v458 = vmax.f32 %v375, 0.0
  %v459 = vmax.f32 %v378, 0.0
  %v460 = vmax.f32 %v380, 0.0
  %v461 = vmax.f32 %v383, 0.0
  %v462 = vmax.f32 %v385, 0.0
  %v463 = vmax.f32 %v388, 0.0
  %v464 = vmax.f32 %v390, 0.0
  %v465 = vmax.f32 %v393, 0.0
  %v466 = vmax.f32 %v395, 0.0
  %v467 = vmax.f32 %v398, 0.0
  %v468 = vmax.f32 %v400, 0.0
  %v469 = vmax.f32 %v403, 0.0
  %v470 = vmax.f32 %v405, 0.0
  %v471 = vpack.c.bf16 %v408, %v407
  %v472 = vpack.c.bf16 %v410, %v409
  %v473 = vpack.c.bf16 %v412, %v411
  %v474 = vpack.c.bf16 %v414, %v413
  %v475 = vpack.c.bf16 %v416, %v415
  %v476 = vpack.c.bf16 %v418, %v417
  %v477 = vpack.c.bf16 %v420, %v419
  %v478 = vpack.c.bf16 %v422, %v421
  %v479 = vpack.c.bf16 %v424, %v423
  %v480 = vpack.c.bf16 %v426, %v425
  %v481 = vpack.c.bf16 %v428, %v427
  %v482 = vpack.c.bf16 %v430, %v429
  %v483 = vpack.c.bf16 %v432, %v431
  %v484 = vpack.c.bf16 %v434, %v433
  %v485 = vpack.c.bf16 %v436, %v435
  %v486 = vpack.c.bf16 %v438, %v437
  %v487 = vpack.c.bf16 %v440, %v439
  %v488 = vpack.c.bf16 %v442, %v441
  %v489 = vpack.c.bf16 %v444, %v443
  %v490 = vpack.c.bf16 %v446, %v445
  %v491 = vpack.c.bf16 %v448, %v447
  %v492 = vpack.c.bf16 %v450, %v449
  %v493 = vpack.c.bf16 %v452, %v451
  %v494 = vpack.c.bf16 %v454, %v453
  %v495 = vpack.c.bf16 %v456, %v455
  %v496 = vpack.c.bf16 %v458, %v457
  %v497 = vpack.c.bf16 %v460, %v459
  %v498 = vpack.c.bf16 %v462, %v461
  %v499 = vpack.c.bf16 %v464, %v463
  %v500 = vpack.c.bf16 %v466, %v465
  %v501 = vpack.c.bf16 %v468, %v467
  %v502 = vpack.c.bf16 %v470, %v469
  %v503 = vld [vmem:[%s3] sm:$0xf]
  %v504 = vld [vmem:[%s3 + $0x4] sm:$0xf]
  %v505 = vld [vmem:[%s3 + $0x8] sm:$0xf]
  %v506 = vld [vmem:[%s3 + $0xc] sm:$0xf]
  %v507 = vld [vmem:[%s3 + $0x10] sm:$0xf]
  %v508 = vld [vmem:[%s3 + $0x14] sm:$0xf]
  %v509 = vld [vmem:[%s3 + $0x18] sm:$0xf]
  %v510 = vld [vmem:[%s3 + $0x1c] sm:$0xf]
  %v511 = vld [vmem:[%s4] sm:$0x1]
  %v513 = vperm.slane %v511, 0
  %v523 = vunpack.c.l.b16 %v503
  %v524 = vunpack.c.l.b16 %v504
  %v525 = vunpack.c.l.b16 %v505
  %v526 = vunpack.c.l.b16 %v506
  %v527 = vunpack.c.l.b16 %v507
  %v528 = vunpack.c.l.b16 %v508
  %v529 = vunpack.c.l.b16 %v509
  %v530 = vunpack.c.l.b16 %v510
  %v531 = vpack.c.b16 %v524, %v523
  %v532 = vpack.c.b16 %v526, %v525
  %v533 = vpack.c.b16 %v528, %v527
  %v534 = vpack.c.b16 %v530, %v529
  %vm539 = vcmask 523264
  %v541 = vsel %vm539, %v471, 0
  %v544 = vsel %vm539, %v472, 0
  %v547 = vsel %vm539, %v473, 0
  %v550 = vsel %vm539, %v474, 0
  %v553 = vsel %vm539, %v475, 0
  %v556 = vsel %vm539, %v476, 0
  %v559 = vsel %vm539, %v477, 0
  %v562 = vsel %vm539, %v478, 0
  %v565 = vsel %vm539, %v479, 0
  %v568 = vsel %vm539, %v480, 0
  %v571 = vsel %vm539, %v481, 0
  %v574 = vsel %vm539, %v482, 0
  %v577 = vsel %vm539, %v483, 0
  %v580 = vsel %vm539, %v484, 0
  %v583 = vsel %vm539, %v485, 0
  %v586 = vsel %vm539, %v486, 0
  %v589 = vsel %vm539, %v487, 0
  %v592 = vsel %vm539, %v488, 0
  %v595 = vsel %vm539, %v489, 0
  %v598 = vsel %vm539, %v490, 0
  %v601 = vsel %vm539, %v491, 0
  %v604 = vsel %vm539, %v492, 0
  %v607 = vsel %vm539, %v493, 0
  %v610 = vsel %vm539, %v494, 0
  %v613 = vsel %vm539, %v495, 0
  %v616 = vsel %vm539, %v496, 0
  %v619 = vsel %vm539, %v497, 0
  %v622 = vsel %vm539, %v498, 0
  %v625 = vsel %vm539, %v499, 0
  %v628 = vsel %vm539, %v500, 0
  %v631 = vsel %vm539, %v501, 0
  %v634 = vsel %vm539, %v502, 0
  %636 = vmatpush.bf16.msra.mxu0 0
  %637 = vmatpush.bf16.msra.mxu0 0
  %638 = vmatpush.bf16.msra.mxu0 0
  %639 = vmatpush.bf16.msra.mxu0 0
  %640 = vmatpush.bf16.msra.mxu0 %v534
  %641 = vmatpush.bf16.msra.mxu0 %v533
  %642 = vmatpush.bf16.msra.mxu0 %v532
  %643 = vmatpush.bf16.msra.mxu0 %v531
  %644 = vmatmul.bf16.gmra.mxu0 %v541
  %v645 = vpop.f32.mrf.mxu0
  %v646 = vadd.f32 %v513, %v645
  %v647 = vpop.f32.mrf.mxu0
  %v648 = vadd.f32 %v513, %v647
  %649 = vmatmul.bf16.gmra.mxu0 %v544
  %v650 = vpop.f32.mrf.mxu0
  %v651 = vadd.f32 %v513, %v650
  %v652 = vpop.f32.mrf.mxu0
  %v653 = vadd.f32 %v513, %v652
  %654 = vmatmul.bf16.gmra.mxu0 %v547
  %v655 = vpop.f32.mrf.mxu0
  %v656 = vadd.f32 %v513, %v655
  %v657 = vpop.f32.mrf.mxu0
  %v658 = vadd.f32 %v513, %v657
  %659 = vmatmul.bf16.gmra.mxu0 %v550
  %v660 = vpop.f32.mrf.mxu0
  %v661 = vadd.f32 %v513, %v660
  %v662 = vpop.f32.mrf.mxu0
  %v663 = vadd.f32 %v513, %v662
  %664 = vmatmul.bf16.gmra.mxu0 %v553
  %v665 = vpop.f32.mrf.mxu0
  %v666 = vadd.f32 %v513, %v665
  %v667 = vpop.f32.mrf.mxu0
  %v668 = vadd.f32 %v513, %v667
  %669 = vmatmul.bf16.gmra.mxu0 %v556
  %v670 = vpop.f32.mrf.mxu0
  %v671 = vadd.f32 %v513, %v670
  %v672 = vpop.f32.mrf.mxu0
  %v673 = vadd.f32 %v513, %v672
  %674 = vmatmul.bf16.gmra.mxu0 %v559
  %v675 = vpop.f32.mrf.mxu0
  %v676 = vadd.f32 %v513, %v675
  %v677 = vpop.f32.mrf.mxu0
  %v678 = vadd.f32 %v513, %v677
  %679 = vmatmul.bf16.gmra.mxu0 %v562
  %v680 = vpop.f32.mrf.mxu0
  %v681 = vadd.f32 %v513, %v680
  %v682 = vpop.f32.mrf.mxu0
  %v683 = vadd.f32 %v513, %v682
  %684 = vmatmul.bf16.gmra.mxu0 %v565
  %v685 = vpop.f32.mrf.mxu0
  %v686 = vadd.f32 %v513, %v685
  %v687 = vpop.f32.mrf.mxu0
  %v688 = vadd.f32 %v513, %v687
  %689 = vmatmul.bf16.gmra.mxu0 %v568
  %v690 = vpop.f32.mrf.mxu0
  %v691 = vadd.f32 %v513, %v690
  %v692 = vpop.f32.mrf.mxu0
  %v693 = vadd.f32 %v513, %v692
  %694 = vmatmul.bf16.gmra.mxu0 %v571
  %v695 = vpop.f32.mrf.mxu0
  %v696 = vadd.f32 %v513, %v695
  %v697 = vpop.f32.mrf.mxu0
  %v698 = vadd.f32 %v513, %v697
  %699 = vmatmul.bf16.gmra.mxu0 %v574
  %v700 = vpop.f32.mrf.mxu0
  %v701 = vadd.f32 %v513, %v700
  %v702 = vpop.f32.mrf.mxu0
  %v703 = vadd.f32 %v513, %v702
  %704 = vmatmul.bf16.gmra.mxu0 %v577
  %v705 = vpop.f32.mrf.mxu0
  %v706 = vadd.f32 %v513, %v705
  %v707 = vpop.f32.mrf.mxu0
  %v708 = vadd.f32 %v513, %v707
  %709 = vmatmul.bf16.gmra.mxu0 %v580
  %v710 = vpop.f32.mrf.mxu0
  %v711 = vadd.f32 %v513, %v710
  %v712 = vpop.f32.mrf.mxu0
  %v713 = vadd.f32 %v513, %v712
  %714 = vmatmul.bf16.gmra.mxu0 %v583
  %v715 = vpop.f32.mrf.mxu0
  %v716 = vadd.f32 %v513, %v715
  %v717 = vpop.f32.mrf.mxu0
  %v718 = vadd.f32 %v513, %v717
  %719 = vmatmul.bf16.gmra.mxu0 %v586
  %v720 = vpop.f32.mrf.mxu0
  %v721 = vadd.f32 %v513, %v720
  %v722 = vpop.f32.mrf.mxu0
  %v723 = vadd.f32 %v513, %v722
  %724 = vmatmul.bf16.gmra.mxu0 %v589
  %v725 = vpop.f32.mrf.mxu0
  %v726 = vadd.f32 %v513, %v725
  %v727 = vpop.f32.mrf.mxu0
  %v728 = vadd.f32 %v513, %v727
  %729 = vmatmul.bf16.gmra.mxu0 %v592
  %v730 = vpop.f32.mrf.mxu0
  %v731 = vadd.f32 %v513, %v730
  %v732 = vpop.f32.mrf.mxu0
  %v733 = vadd.f32 %v513, %v732
  %734 = vmatmul.bf16.gmra.mxu0 %v595
  %v735 = vpop.f32.mrf.mxu0
  %v736 = vadd.f32 %v513, %v735
  %v737 = vpop.f32.mrf.mxu0
  %v738 = vadd.f32 %v513, %v737
  %739 = vmatmul.bf16.gmra.mxu0 %v598
  %v740 = vpop.f32.mrf.mxu0
  %v741 = vadd.f32 %v513, %v740
  %v742 = vpop.f32.mrf.mxu0
  %v743 = vadd.f32 %v513, %v742
  %744 = vmatmul.bf16.gmra.mxu0 %v601
  %v745 = vpop.f32.mrf.mxu0
  %v746 = vadd.f32 %v513, %v745
  %v747 = vpop.f32.mrf.mxu0
  %v748 = vadd.f32 %v513, %v747
  %749 = vmatmul.bf16.gmra.mxu0 %v604
  %v750 = vpop.f32.mrf.mxu0
  %v751 = vadd.f32 %v513, %v750
  %v752 = vpop.f32.mrf.mxu0
  %v753 = vadd.f32 %v513, %v752
  %754 = vmatmul.bf16.gmra.mxu0 %v607
  %v755 = vpop.f32.mrf.mxu0
  %v756 = vadd.f32 %v513, %v755
  %v757 = vpop.f32.mrf.mxu0
  %v758 = vadd.f32 %v513, %v757
  %759 = vmatmul.bf16.gmra.mxu0 %v610
  %v760 = vpop.f32.mrf.mxu0
  %v761 = vadd.f32 %v513, %v760
  %v762 = vpop.f32.mrf.mxu0
  %v763 = vadd.f32 %v513, %v762
  %764 = vmatmul.bf16.gmra.mxu0 %v613
  %v765 = vpop.f32.mrf.mxu0
  %v766 = vadd.f32 %v513, %v765
  %v767 = vpop.f32.mrf.mxu0
  %v768 = vadd.f32 %v513, %v767
  %769 = vmatmul.bf16.gmra.mxu0 %v616
  %v770 = vpop.f32.mrf.mxu0
  %v771 = vadd.f32 %v513, %v770
  %v772 = vpop.f32.mrf.mxu0
  %v773 = vadd.f32 %v513, %v772
  %774 = vmatmul.bf16.gmra.mxu0 %v619
  %v775 = vpop.f32.mrf.mxu0
  %v776 = vadd.f32 %v513, %v775
  %v777 = vpop.f32.mrf.mxu0
  %v778 = vadd.f32 %v513, %v777
  %779 = vmatmul.bf16.gmra.mxu0 %v622
  %v780 = vpop.f32.mrf.mxu0
  %v781 = vadd.f32 %v513, %v780
  %v782 = vpop.f32.mrf.mxu0
  %v783 = vadd.f32 %v513, %v782
  %784 = vmatmul.bf16.gmra.mxu0 %v625
  %v785 = vpop.f32.mrf.mxu0
  %v786 = vadd.f32 %v513, %v785
  %v787 = vpop.f32.mrf.mxu0
  %v788 = vadd.f32 %v513, %v787
  %789 = vmatmul.bf16.gmra.mxu0 %v628
  %v790 = vpop.f32.mrf.mxu0
  %v791 = vadd.f32 %v513, %v790
  %v792 = vpop.f32.mrf.mxu0
  %v793 = vadd.f32 %v513, %v792
  %794 = vmatmul.bf16.gmra.mxu0 %v631
  %v795 = vpop.f32.mrf.mxu0
  %v796 = vadd.f32 %v513, %v795
  %v797 = vpop.f32.mrf.mxu0
  %v798 = vadd.f32 %v513, %v797
  %799 = vmatmul.bf16.gmra.mxu0 %v634
  %v800 = vpop.f32.mrf.mxu0
  %v801 = vadd.f32 %v513, %v800
  %v802 = vpop.f32.mrf.mxu0
  %v803 = vadd.f32 %v513, %v802
  %804 = vdwg.mxu0
  %v805 = vmax.f32 %v646, 0.0
  %v806 = vmax.f32 %v648, 0.0
  %v807 = vmax.f32 %v651, 0.0
  %v808 = vmax.f32 %v653, 0.0
  %v809 = vmax.f32 %v656, 0.0
  %v810 = vmax.f32 %v658, 0.0
  %v811 = vmax.f32 %v661, 0.0
  %v812 = vmax.f32 %v663, 0.0
  %v813 = vmax.f32 %v666, 0.0
  %v814 = vmax.f32 %v668, 0.0
  %v815 = vmax.f32 %v671, 0.0
  %v816 = vmax.f32 %v673, 0.0
  %v817 = vmax.f32 %v676, 0.0
  %v818 = vmax.f32 %v678, 0.0
  %v819 = vmax.f32 %v681, 0.0
  %v820 = vmax.f32 %v683, 0.0
  %v821 = vmax.f32 %v686, 0.0
  %v822 = vmax.f32 %v688, 0.0
  %v823 = vmax.f32 %v691, 0.0
  %v824 = vmax.f32 %v693, 0.0
  %v825 = vmax.f32 %v696, 0.0
  %v826 = vmax.f32 %v698, 0.0
  %v827 = vmax.f32 %v701, 0.0
  %v828 = vmax.f32 %v703, 0.0
  %v829 = vmax.f32 %v706, 0.0
  %v830 = vmax.f32 %v708, 0.0
  %v831 = vmax.f32 %v711, 0.0
  %v832 = vmax.f32 %v713, 0.0
  %v833 = vmax.f32 %v716, 0.0
  %v834 = vmax.f32 %v718, 0.0
  %v835 = vmax.f32 %v721, 0.0
  %v836 = vmax.f32 %v723, 0.0
  %v837 = vmax.f32 %v726, 0.0
  %v838 = vmax.f32 %v728, 0.0
  %v839 = vmax.f32 %v731, 0.0
  %v840 = vmax.f32 %v733, 0.0
  %v841 = vmax.f32 %v736, 0.0
  %v842 = vmax.f32 %v738, 0.0
  %v843 = vmax.f32 %v741, 0.0
  %v844 = vmax.f32 %v743, 0.0
  %v845 = vmax.f32 %v746, 0.0
  %v846 = vmax.f32 %v748, 0.0
  %v847 = vmax.f32 %v751, 0.0
  %v848 = vmax.f32 %v753, 0.0
  %v849 = vmax.f32 %v756, 0.0
  %v850 = vmax.f32 %v758, 0.0
  %v851 = vmax.f32 %v761, 0.0
  %v852 = vmax.f32 %v763, 0.0
  %v853 = vmax.f32 %v766, 0.0
  %v854 = vmax.f32 %v768, 0.0
  %v855 = vmax.f32 %v771, 0.0
  %v856 = vmax.f32 %v773, 0.0
  %v857 = vmax.f32 %v776, 0.0
  %v858 = vmax.f32 %v778, 0.0
  %v859 = vmax.f32 %v781, 0.0
  %v860 = vmax.f32 %v783, 0.0
  %v861 = vmax.f32 %v786, 0.0
  %v862 = vmax.f32 %v788, 0.0
  %v863 = vmax.f32 %v791, 0.0
  %v864 = vmax.f32 %v793, 0.0
  %v865 = vmax.f32 %v796, 0.0
  %v866 = vmax.f32 %v798, 0.0
  %v867 = vmax.f32 %v801, 0.0
  %v868 = vmax.f32 %v803, 0.0
  %v869 = vpack.c.bf16 %v806, %v805
  %v870 = vpack.c.bf16 %v808, %v807
  %v871 = vpack.c.bf16 %v810, %v809
  %v872 = vpack.c.bf16 %v812, %v811
  %v873 = vpack.c.bf16 %v814, %v813
  %v874 = vpack.c.bf16 %v816, %v815
  %v875 = vpack.c.bf16 %v818, %v817
  %v876 = vpack.c.bf16 %v820, %v819
  %v877 = vpack.c.bf16 %v822, %v821
  %v878 = vpack.c.bf16 %v824, %v823
  %v879 = vpack.c.bf16 %v826, %v825
  %v880 = vpack.c.bf16 %v828, %v827
  %v881 = vpack.c.bf16 %v830, %v829
  %v882 = vpack.c.bf16 %v832, %v831
  %v883 = vpack.c.bf16 %v834, %v833
  %v884 = vpack.c.bf16 %v836, %v835
  %v885 = vpack.c.bf16 %v838, %v837
  %v886 = vpack.c.bf16 %v840, %v839
  %v887 = vpack.c.bf16 %v842, %v841
  %v888 = vpack.c.bf16 %v844, %v843
  %v889 = vpack.c.bf16 %v846, %v845
  %v890 = vpack.c.bf16 %v848, %v847
  %v891 = vpack.c.bf16 %v850, %v849
  %v892 = vpack.c.bf16 %v852, %v851
  %v893 = vpack.c.bf16 %v854, %v853
  %v894 = vpack.c.bf16 %v856, %v855
  %v895 = vpack.c.bf16 %v858, %v857
  %v896 = vpack.c.bf16 %v860, %v859
  %v897 = vpack.c.bf16 %v862, %v861
  %v898 = vpack.c.bf16 %v864, %v863
  %v899 = vpack.c.bf16 %v866, %v865
  %v900 = vpack.c.bf16 %v868, %v867
  %v901 = vld [vmem:[%s5] sm:$0xff]
  %v902 = vld [vmem:[%s5 + $0x8] sm:$0xff]
  %v903 = vld [vmem:[%s5 + $0x10] sm:$0xff]
  %v904 = vld [vmem:[%s5 + $0x18] sm:$0xff]
  %v905 = vld [vmem:[%s5 + $0x20] sm:$0xff]
  %v906 = vld [vmem:[%s5 + $0x28] sm:$0xff]
  %v907 = vld [vmem:[%s5 + $0x30] sm:$0xff]
  %v908 = vld [vmem:[%s5 + $0x38] sm:$0xff]
  %v909 = vld [vmem:[%s5 + $0x40] sm:$0xff]
  %v910 = vld [vmem:[%s5 + $0x48] sm:$0xff]
  %v911 = vld [vmem:[%s5 + $0x50] sm:$0xff]
  %v912 = vld [vmem:[%s5 + $0x58] sm:$0xff]
  %v913 = vld [vmem:[%s5 + $0x60] sm:$0xff]
  %v914 = vld [vmem:[%s5 + $0x68] sm:$0xff]
  %v915 = vld [vmem:[%s5 + $0x70] sm:$0xff]
  %v916 = vld [vmem:[%s5 + $0x78] sm:$0xff]
  %v917 = vld [vmem:[%s6] sm:$0x3]
  %v919 = vperm.slane %v917, 0
  %v920 = vperm.slane %v917, 1
  %v939 = vunpack.c.l.b16 %v901
  %v940 = vunpack.c.h.b16 %v901
  %v941 = vunpack.c.l.b16 %v902
  %v942 = vunpack.c.h.b16 %v902
  %v943 = vunpack.c.l.b16 %v903
  %v944 = vunpack.c.h.b16 %v903
  %v945 = vunpack.c.l.b16 %v904
  %v946 = vunpack.c.h.b16 %v904
  %v947 = vunpack.c.l.b16 %v905
  %v948 = vunpack.c.h.b16 %v905
  %v949 = vunpack.c.l.b16 %v906
  %v950 = vunpack.c.h.b16 %v906
  %v951 = vunpack.c.l.b16 %v907
  %v952 = vunpack.c.h.b16 %v907
  %v953 = vunpack.c.l.b16 %v908
  %v954 = vunpack.c.h.b16 %v908
  %v955 = vunpack.c.l.b16 %v909
  %v956 = vunpack.c.h.b16 %v909
  %v957 = vunpack.c.l.b16 %v910
  %v958 = vunpack.c.h.b16 %v910
  %v959 = vunpack.c.l.b16 %v911
  %v960 = vunpack.c.h.b16 %v911
  %v961 = vunpack.c.l.b16 %v912
  %v962 = vunpack.c.h.b16 %v912
  %v963 = vunpack.c.l.b16 %v913
  %v964 = vunpack.c.h.b16 %v913
  %v965 = vunpack.c.l.b16 %v914
  %v966 = vunpack.c.h.b16 %v914
  %v967 = vunpack.c.l.b16 %v915
  %v968 = vunpack.c.h.b16 %v915
  %v969 = vunpack.c.l.b16 %v916
  %v970 = vunpack.c.h.b16 %v916
  %v971 = vpack.c.b16 %v941, %v939
  %v972 = vpack.c.b16 %v942, %v940
  %v973 = vpack.c.b16 %v945, %v943
  %v974 = vpack.c.b16 %v946, %v944
  %v975 = vpack.c.b16 %v949, %v947
  %v976 = vpack.c.b16 %v950, %v948
  %v977 = vpack.c.b16 %v953, %v951
  %v978 = vpack.c.b16 %v954, %v952
  %v979 = vpack.c.b16 %v957, %v955
  %v980 = vpack.c.b16 %v958, %v956
  %v981 = vpack.c.b16 %v961, %v959
  %v982 = vpack.c.b16 %v962, %v960
  %v983 = vpack.c.b16 %v965, %v963
  %v984 = vpack.c.b16 %v966, %v964
  %v985 = vpack.c.b16 %v969, %v967
  %v986 = vpack.c.b16 %v970, %v968
  %1003 = vmatpush.bf16.msra.mxu0 %v985
  %1004 = vmatpush.bf16.msra.mxu0 %v983
  %1005 = vmatpush.bf16.msra.mxu0 %v981
  %1006 = vmatpush.bf16.msra.mxu0 %v979
  %1007 = vmatpush.bf16.msra.mxu0 %v977
  %1008 = vmatpush.bf16.msra.mxu0 %v975
  %1009 = vmatpush.bf16.msra.mxu0 %v973
  %1010 = vmatpush.bf16.msra.mxu0 %v971
  %1011 = vmatmul.bf16.gmra.mxu0 %v869
  %v1012 = vpop.f32.mrf.mxu0
  %v1013 = vadd.f32 %v919, %v1012
  %v1014 = vpop.f32.mrf.mxu0
  %v1015 = vadd.f32 %v919, %v1014
  %1016 = vmatmul.bf16.gmra.mxu0 %v870
  %v1017 = vpop.f32.mrf.mxu0
  %v1018 = vadd.f32 %v919, %v1017
  %v1019 = vpop.f32.mrf.mxu0
  %v1020 = vadd.f32 %v919, %v1019
  %1021 = vmatmul.bf16.gmra.mxu0 %v871
  %v1022 = vpop.f32.mrf.mxu0
  %v1023 = vadd.f32 %v919, %v1022
  %v1024 = vpop.f32.mrf.mxu0
  %v1025 = vadd.f32 %v919, %v1024
  %1026 = vmatmul.bf16.gmra.mxu0 %v872
  %v1027 = vpop.f32.mrf.mxu0
  %v1028 = vadd.f32 %v919, %v1027
  %v1029 = vpop.f32.mrf.mxu0
  %v1030 = vadd.f32 %v919, %v1029
  %1031 = vmatmul.bf16.gmra.mxu0 %v873
  %v1032 = vpop.f32.mrf.mxu0
  %v1033 = vadd.f32 %v919, %v1032
  %v1034 = vpop.f32.mrf.mxu0
  %v1035 = vadd.f32 %v919, %v1034
  %1036 = vmatmul.bf16.gmra.mxu0 %v874
  %v1037 = vpop.f32.mrf.mxu0
  %v1038 = vadd.f32 %v919, %v1037
  %v1039 = vpop.f32.mrf.mxu0
  %v1040 = vadd.f32 %v919, %v1039
  %1041 = vmatmul.bf16.gmra.mxu0 %v875
  %v1042 = vpop.f32.mrf.mxu0
  %v1043 = vadd.f32 %v919, %v1042
  %v1044 = vpop.f32.mrf.mxu0
  %v1045 = vadd.f32 %v919, %v1044
  %1046 = vmatmul.bf16.gmra.mxu0 %v876
  %v1047 = vpop.f32.mrf.mxu0
  %v1048 = vadd.f32 %v919, %v1047
  %v1049 = vpop.f32.mrf.mxu0
  %v1050 = vadd.f32 %v919, %v1049
  %1051 = vmatmul.bf16.gmra.mxu0 %v877
  %v1052 = vpop.f32.mrf.mxu0
  %v1053 = vadd.f32 %v919, %v1052
  %v1054 = vpop.f32.mrf.mxu0
  %v1055 = vadd.f32 %v919, %v1054
  %1056 = vmatmul.bf16.gmra.mxu0 %v878
  %v1057 = vpop.f32.mrf.mxu0
  %v1058 = vadd.f32 %v919, %v1057
  %v1059 = vpop.f32.mrf.mxu0
  %v1060 = vadd.f32 %v919, %v1059
  %1061 = vmatmul.bf16.gmra.mxu0 %v879
  %v1062 = vpop.f32.mrf.mxu0
  %v1063 = vadd.f32 %v919, %v1062
  %v1064 = vpop.f32.mrf.mxu0
  %v1065 = vadd.f32 %v919, %v1064
  %1066 = vmatmul.bf16.gmra.mxu0 %v880
  %v1067 = vpop.f32.mrf.mxu0
  %v1068 = vadd.f32 %v919, %v1067
  %v1069 = vpop.f32.mrf.mxu0
  %v1070 = vadd.f32 %v919, %v1069
  %1071 = vmatmul.bf16.gmra.mxu0 %v881
  %v1072 = vpop.f32.mrf.mxu0
  %v1073 = vadd.f32 %v919, %v1072
  %v1074 = vpop.f32.mrf.mxu0
  %v1075 = vadd.f32 %v919, %v1074
  %1076 = vmatmul.bf16.gmra.mxu0 %v882
  %v1077 = vpop.f32.mrf.mxu0
  %v1078 = vadd.f32 %v919, %v1077
  %v1079 = vpop.f32.mrf.mxu0
  %v1080 = vadd.f32 %v919, %v1079
  %1081 = vmatmul.bf16.gmra.mxu0 %v883
  %v1082 = vpop.f32.mrf.mxu0
  %v1083 = vadd.f32 %v919, %v1082
  %v1084 = vpop.f32.mrf.mxu0
  %v1085 = vadd.f32 %v919, %v1084
  %1086 = vmatmul.bf16.gmra.mxu0 %v884
  %v1087 = vpop.f32.mrf.mxu0
  %v1088 = vadd.f32 %v919, %v1087
  %v1089 = vpop.f32.mrf.mxu0
  %v1090 = vadd.f32 %v919, %v1089
  %1091 = vmatmul.bf16.gmra.mxu0 %v885
  %v1092 = vpop.f32.mrf.mxu0
  %v1093 = vadd.f32 %v919, %v1092
  %v1094 = vpop.f32.mrf.mxu0
  %v1095 = vadd.f32 %v919, %v1094
  %1096 = vmatmul.bf16.gmra.mxu0 %v886
  %v1097 = vpop.f32.mrf.mxu0
  %v1098 = vadd.f32 %v919, %v1097
  %v1099 = vpop.f32.mrf.mxu0
  %v1100 = vadd.f32 %v919, %v1099
  %1101 = vmatmul.bf16.gmra.mxu0 %v887
  %v1102 = vpop.f32.mrf.mxu0
  %v1103 = vadd.f32 %v919, %v1102
  %v1104 = vpop.f32.mrf.mxu0
  %v1105 = vadd.f32 %v919, %v1104
  %1106 = vmatmul.bf16.gmra.mxu0 %v888
  %v1107 = vpop.f32.mrf.mxu0
  %v1108 = vadd.f32 %v919, %v1107
  %v1109 = vpop.f32.mrf.mxu0
  %v1110 = vadd.f32 %v919, %v1109
  %1111 = vmatmul.bf16.gmra.mxu0 %v889
  %v1112 = vpop.f32.mrf.mxu0
  %v1113 = vadd.f32 %v919, %v1112
  %v1114 = vpop.f32.mrf.mxu0
  %v1115 = vadd.f32 %v919, %v1114
  %1116 = vmatmul.bf16.gmra.mxu0 %v890
  %v1117 = vpop.f32.mrf.mxu0
  %v1118 = vadd.f32 %v919, %v1117
  %v1119 = vpop.f32.mrf.mxu0
  %v1120 = vadd.f32 %v919, %v1119
  %1121 = vmatmul.bf16.gmra.mxu0 %v891
  %v1122 = vpop.f32.mrf.mxu0
  %v1123 = vadd.f32 %v919, %v1122
  %v1124 = vpop.f32.mrf.mxu0
  %v1125 = vadd.f32 %v919, %v1124
  %1126 = vmatmul.bf16.gmra.mxu0 %v892
  %v1127 = vpop.f32.mrf.mxu0
  %v1128 = vadd.f32 %v919, %v1127
  %v1129 = vpop.f32.mrf.mxu0
  %v1130 = vadd.f32 %v919, %v1129
  %1131 = vmatmul.bf16.gmra.mxu0 %v893
  %v1132 = vpop.f32.mrf.mxu0
  %v1133 = vadd.f32 %v919, %v1132
  %v1134 = vpop.f32.mrf.mxu0
  %v1135 = vadd.f32 %v919, %v1134
  %1136 = vmatmul.bf16.gmra.mxu0 %v894
  %v1137 = vpop.f32.mrf.mxu0
  %v1138 = vadd.f32 %v919, %v1137
  %v1139 = vpop.f32.mrf.mxu0
  %v1140 = vadd.f32 %v919, %v1139
  %1141 = vmatmul.bf16.gmra.mxu0 %v895
  %v1142 = vpop.f32.mrf.mxu0
  %v1143 = vadd.f32 %v919, %v1142
  %v1144 = vpop.f32.mrf.mxu0
  %v1145 = vadd.f32 %v919, %v1144
  %1146 = vmatmul.bf16.gmra.mxu0 %v896
  %v1147 = vpop.f32.mrf.mxu0
  %v1148 = vadd.f32 %v919, %v1147
  %v1149 = vpop.f32.mrf.mxu0
  %v1150 = vadd.f32 %v919, %v1149
  %1151 = vmatmul.bf16.gmra.mxu0 %v897
  %v1152 = vpop.f32.mrf.mxu0
  %v1153 = vadd.f32 %v919, %v1152
  %v1154 = vpop.f32.mrf.mxu0
  %v1155 = vadd.f32 %v919, %v1154
  %1156 = vmatmul.bf16.gmra.mxu0 %v898
  %v1157 = vpop.f32.mrf.mxu0
  %v1158 = vadd.f32 %v919, %v1157
  %v1159 = vpop.f32.mrf.mxu0
  %v1160 = vadd.f32 %v919, %v1159
  %1161 = vmatmul.bf16.gmra.mxu0 %v899
  %v1162 = vpop.f32.mrf.mxu0
  %v1163 = vadd.f32 %v919, %v1162
  %v1164 = vpop.f32.mrf.mxu0
  %v1165 = vadd.f32 %v919, %v1164
  %1166 = vmatmul.bf16.gmra.mxu0 %v900
  %v1167 = vpop.f32.mrf.mxu0
  %v1168 = vadd.f32 %v919, %v1167
  %v1169 = vpop.f32.mrf.mxu0
  %v1170 = vadd.f32 %v919, %v1169
  %1171 = vdwg.mxu0
  %1172 = vmatpush.bf16.msra.mxu0 %v986
  %1173 = vmatpush.bf16.msra.mxu0 %v984
  %1174 = vmatpush.bf16.msra.mxu0 %v982
  %1175 = vmatpush.bf16.msra.mxu0 %v980
  %1176 = vmatpush.bf16.msra.mxu0 %v978
  %1177 = vmatpush.bf16.msra.mxu0 %v976
  %1178 = vmatpush.bf16.msra.mxu0 %v974
  %1179 = vmatpush.bf16.msra.mxu0 %v972
  %1180 = vmatmul.bf16.gmra.mxu0 %v869
  %v1181 = vpop.f32.mrf.mxu0
  %v1182 = vadd.f32 %v920, %v1181
  %v1183 = vpop.f32.mrf.mxu0
  %v1184 = vadd.f32 %v920, %v1183
  %1185 = vmatmul.bf16.gmra.mxu0 %v870
  %v1186 = vpop.f32.mrf.mxu0
  %v1187 = vadd.f32 %v920, %v1186
  %v1188 = vpop.f32.mrf.mxu0
  %v1189 = vadd.f32 %v920, %v1188
  %1190 = vmatmul.bf16.gmra.mxu0 %v871
  %v1191 = vpop.f32.mrf.mxu0
  %v1192 = vadd.f32 %v920, %v1191
  %v1193 = vpop.f32.mrf.mxu0
  %v1194 = vadd.f32 %v920, %v1193
  %1195 = vmatmul.bf16.gmra.mxu0 %v872
  %v1196 = vpop.f32.mrf.mxu0
  %v1197 = vadd.f32 %v920, %v1196
  %v1198 = vpop.f32.mrf.mxu0
  %v1199 = vadd.f32 %v920, %v1198
  %1200 = vmatmul.bf16.gmra.mxu0 %v873
  %v1201 = vpop.f32.mrf.mxu0
  %v1202 = vadd.f32 %v920, %v1201
  %v1203 = vpop.f32.mrf.mxu0
  %v1204 = vadd.f32 %v920, %v1203
  %1205 = vmatmul.bf16.gmra.mxu0 %v874
  %v1206 = vpop.f32.mrf.mxu0
  %v1207 = vadd.f32 %v920, %v1206
  %v1208 = vpop.f32.mrf.mxu0
  %v1209 = vadd.f32 %v920, %v1208
  %1210 = vmatmul.bf16.gmra.mxu0 %v875
  %v1211 = vpop.f32.mrf.mxu0
  %v1212 = vadd.f32 %v920, %v1211
  %v1213 = vpop.f32.mrf.mxu0
  %v1214 = vadd.f32 %v920, %v1213
  %1215 = vmatmul.bf16.gmra.mxu0 %v876
  %v1216 = vpop.f32.mrf.mxu0
  %v1217 = vadd.f32 %v920, %v1216
  %v1218 = vpop.f32.mrf.mxu0
  %v1219 = vadd.f32 %v920, %v1218
  %1220 = vmatmul.bf16.gmra.mxu0 %v877
  %v1221 = vpop.f32.mrf.mxu0
  %v1222 = vadd.f32 %v920, %v1221
  %v1223 = vpop.f32.mrf.mxu0
  %v1224 = vadd.f32 %v920, %v1223
  %1225 = vmatmul.bf16.gmra.mxu0 %v878
  %v1226 = vpop.f32.mrf.mxu0
  %v1227 = vadd.f32 %v920, %v1226
  %v1228 = vpop.f32.mrf.mxu0
  %v1229 = vadd.f32 %v920, %v1228
  %1230 = vmatmul.bf16.gmra.mxu0 %v879
  %v1231 = vpop.f32.mrf.mxu0
  %v1232 = vadd.f32 %v920, %v1231
  %v1233 = vpop.f32.mrf.mxu0
  %v1234 = vadd.f32 %v920, %v1233
  %1235 = vmatmul.bf16.gmra.mxu0 %v880
  %v1236 = vpop.f32.mrf.mxu0
  %v1237 = vadd.f32 %v920, %v1236
  %v1238 = vpop.f32.mrf.mxu0
  %v1239 = vadd.f32 %v920, %v1238
  %1240 = vmatmul.bf16.gmra.mxu0 %v881
  %v1241 = vpop.f32.mrf.mxu0
  %v1242 = vadd.f32 %v920, %v1241
  %v1243 = vpop.f32.mrf.mxu0
  %v1244 = vadd.f32 %v920, %v1243
  %1245 = vmatmul.bf16.gmra.mxu0 %v882
  %v1246 = vpop.f32.mrf.mxu0
  %v1247 = vadd.f32 %v920, %v1246
  %v1248 = vpop.f32.mrf.mxu0
  %v1249 = vadd.f32 %v920, %v1248
  %1250 = vmatmul.bf16.gmra.mxu0 %v883
  %v1251 = vpop.f32.mrf.mxu0
  %v1252 = vadd.f32 %v920, %v1251
  %v1253 = vpop.f32.mrf.mxu0
  %v1254 = vadd.f32 %v920, %v1253
  %1255 = vmatmul.bf16.gmra.mxu0 %v884
  %v1256 = vpop.f32.mrf.mxu0
  %v1257 = vadd.f32 %v920, %v1256
  %v1258 = vpop.f32.mrf.mxu0
  %v1259 = vadd.f32 %v920, %v1258
  %1260 = vmatmul.bf16.gmra.mxu0 %v885
  %v1261 = vpop.f32.mrf.mxu0
  %v1262 = vadd.f32 %v920, %v1261
  %v1263 = vpop.f32.mrf.mxu0
  %v1264 = vadd.f32 %v920, %v1263
  %1265 = vmatmul.bf16.gmra.mxu0 %v886
  %v1266 = vpop.f32.mrf.mxu0
  %v1267 = vadd.f32 %v920, %v1266
  %v1268 = vpop.f32.mrf.mxu0
  %v1269 = vadd.f32 %v920, %v1268
  %1270 = vmatmul.bf16.gmra.mxu0 %v887
  %v1271 = vpop.f32.mrf.mxu0
  %v1272 = vadd.f32 %v920, %v1271
  %v1273 = vpop.f32.mrf.mxu0
  %v1274 = vadd.f32 %v920, %v1273
  %1275 = vmatmul.bf16.gmra.mxu0 %v888
  %v1276 = vpop.f32.mrf.mxu0
  %v1277 = vadd.f32 %v920, %v1276
  %v1278 = vpop.f32.mrf.mxu0
  %v1279 = vadd.f32 %v920, %v1278
  %1280 = vmatmul.bf16.gmra.mxu0 %v889
  %v1281 = vpop.f32.mrf.mxu0
  %v1282 = vadd.f32 %v920, %v1281
  %v1283 = vpop.f32.mrf.mxu0
  %v1284 = vadd.f32 %v920, %v1283
  %1285 = vmatmul.bf16.gmra.mxu0 %v890
  %v1286 = vpop.f32.mrf.mxu0
  %v1287 = vadd.f32 %v920, %v1286
  %v1288 = vpop.f32.mrf.mxu0
  %v1289 = vadd.f32 %v920, %v1288
  %1290 = vmatmul.bf16.gmra.mxu0 %v891
  %v1291 = vpop.f32.mrf.mxu0
  %v1292 = vadd.f32 %v920, %v1291
  %v1293 = vpop.f32.mrf.mxu0
  %v1294 = vadd.f32 %v920, %v1293
  %1295 = vmatmul.bf16.gmra.mxu0 %v892
  %v1296 = vpop.f32.mrf.mxu0
  %v1297 = vadd.f32 %v920, %v1296
  %v1298 = vpop.f32.mrf.mxu0
  %v1299 = vadd.f32 %v920, %v1298
  %1300 = vmatmul.bf16.gmra.mxu0 %v893
  %v1301 = vpop.f32.mrf.mxu0
  %v1302 = vadd.f32 %v920, %v1301
  %v1303 = vpop.f32.mrf.mxu0
  %v1304 = vadd.f32 %v920, %v1303
  %1305 = vmatmul.bf16.gmra.mxu0 %v894
  %v1306 = vpop.f32.mrf.mxu0
  %v1307 = vadd.f32 %v920, %v1306
  %v1308 = vpop.f32.mrf.mxu0
  %v1309 = vadd.f32 %v920, %v1308
  %1310 = vmatmul.bf16.gmra.mxu0 %v895
  %v1311 = vpop.f32.mrf.mxu0
  %v1312 = vadd.f32 %v920, %v1311
  %v1313 = vpop.f32.mrf.mxu0
  %v1314 = vadd.f32 %v920, %v1313
  %1315 = vmatmul.bf16.gmra.mxu0 %v896
  %v1316 = vpop.f32.mrf.mxu0
  %v1317 = vadd.f32 %v920, %v1316
  %v1318 = vpop.f32.mrf.mxu0
  %v1319 = vadd.f32 %v920, %v1318
  %1320 = vmatmul.bf16.gmra.mxu0 %v897
  %v1321 = vpop.f32.mrf.mxu0
  %v1322 = vadd.f32 %v920, %v1321
  %v1323 = vpop.f32.mrf.mxu0
  %v1324 = vadd.f32 %v920, %v1323
  %1325 = vmatmul.bf16.gmra.mxu0 %v898
  %v1326 = vpop.f32.mrf.mxu0
  %v1327 = vadd.f32 %v920, %v1326
  %v1328 = vpop.f32.mrf.mxu0
  %v1329 = vadd.f32 %v920, %v1328
  %1330 = vmatmul.bf16.gmra.mxu0 %v899
  %v1331 = vpop.f32.mrf.mxu0
  %v1332 = vadd.f32 %v920, %v1331
  %v1333 = vpop.f32.mrf.mxu0
  %v1334 = vadd.f32 %v920, %v1333
  %1335 = vmatmul.bf16.gmra.mxu0 %v900
  %v1336 = vpop.f32.mrf.mxu0
  %v1337 = vadd.f32 %v920, %v1336
  %v1338 = vpop.f32.mrf.mxu0
  %v1339 = vadd.f32 %v920, %v1338
  %1340 = vdwg.mxu0
  %v1341 = vmax.f32 %v1013, 0.0
  %v1342 = vmax.f32 %v1182, 0.0
  %v1343 = vmax.f32 %v1015, 0.0
  %v1344 = vmax.f32 %v1184, 0.0
  %v1345 = vmax.f32 %v1018, 0.0
  %v1346 = vmax.f32 %v1187, 0.0
  %v1347 = vmax.f32 %v1020, 0.0
  %v1348 = vmax.f32 %v1189, 0.0
  %v1349 = vmax.f32 %v1023, 0.0
  %v1350 = vmax.f32 %v1192, 0.0
  %v1351 = vmax.f32 %v1025, 0.0
  %v1352 = vmax.f32 %v1194, 0.0
  %v1353 = vmax.f32 %v1028, 0.0
  %v1354 = vmax.f32 %v1197, 0.0
  %v1355 = vmax.f32 %v1030, 0.0
  %v1356 = vmax.f32 %v1199, 0.0
  %v1357 = vmax.f32 %v1033, 0.0
  %v1358 = vmax.f32 %v1202, 0.0
  %v1359 = vmax.f32 %v1035, 0.0
  %v1360 = vmax.f32 %v1204, 0.0
  %v1361 = vmax.f32 %v1038, 0.0
  %v1362 = vmax.f32 %v1207, 0.0
  %v1363 = vmax.f32 %v1040, 0.0
  %v1364 = vmax.f32 %v1209, 0.0
  %v1365 = vmax.f32 %v1043, 0.0
  %v1366 = vmax.f32 %v1212, 0.0
  %v1367 = vmax.f32 %v1045, 0.0
  %v1368 = vmax.f32 %v1214, 0.0
  %v1369 = vmax.f32 %v1048, 0.0
  %v1370 = vmax.f32 %v1217, 0.0
  %v1371 = vmax.f32 %v1050, 0.0
  %v1372 = vmax.f32 %v1219, 0.0
  %v1373 = vmax.f32 %v1053, 0.0
  %v1374 = vmax.f32 %v1222, 0.0
  %v1375 = vmax.f32 %v1055, 0.0
  %v1376 = vmax.f32 %v1224, 0.0
  %v1377 = vmax.f32 %v1058, 0.0
  %v1378 = vmax.f32 %v1227, 0.0
  %v1379 = vmax.f32 %v1060, 0.0
  %v1380 = vmax.f32 %v1229, 0.0
  %v1381 = vmax.f32 %v1063, 0.0
  %v1382 = vmax.f32 %v1232, 0.0
  %v1383 = vmax.f32 %v1065, 0.0
  %v1384 = vmax.f32 %v1234, 0.0
  %v1385 = vmax.f32 %v1068, 0.0
  %v1386 = vmax.f32 %v1237, 0.0
  %v1387 = vmax.f32 %v1070, 0.0
  %v1388 = vmax.f32 %v1239, 0.0
  %v1389 = vmax.f32 %v1073, 0.0
  %v1390 = vmax.f32 %v1242, 0.0
  %v1391 = vmax.f32 %v1075, 0.0
  %v1392 = vmax.f32 %v1244, 0.0
  %v1393 = vmax.f32 %v1078, 0.0
  %v1394 = vmax.f32 %v1247, 0.0
  %v1395 = vmax.f32 %v1080, 0.0
  %v1396 = vmax.f32 %v1249, 0.0
  %v1397 = vmax.f32 %v1083, 0.0
  %v1398 = vmax.f32 %v1252, 0.0
  %v1399 = vmax.f32 %v1085, 0.0
  %v1400 = vmax.f32 %v1254, 0.0
  %v1401 = vmax.f32 %v1088, 0.0
  %v1402 = vmax.f32 %v1257, 0.0
  %v1403 = vmax.f32 %v1090, 0.0
  %v1404 = vmax.f32 %v1259, 0.0
  %v1405 = vmax.f32 %v1093, 0.0
  %v1406 = vmax.f32 %v1262, 0.0
  %v1407 = vmax.f32 %v1095, 0.0
  %v1408 = vmax.f32 %v1264, 0.0
  %v1409 = vmax.f32 %v1098, 0.0
  %v1410 = vmax.f32 %v1267, 0.0
  %v1411 = vmax.f32 %v1100, 0.0
  %v1412 = vmax.f32 %v1269, 0.0
  %v1413 = vmax.f32 %v1103, 0.0
  %v1414 = vmax.f32 %v1272, 0.0
  %v1415 = vmax.f32 %v1105, 0.0
  %v1416 = vmax.f32 %v1274, 0.0
  %v1417 = vmax.f32 %v1108, 0.0
  %v1418 = vmax.f32 %v1277, 0.0
  %v1419 = vmax.f32 %v1110, 0.0
  %v1420 = vmax.f32 %v1279, 0.0
  %v1421 = vmax.f32 %v1113, 0.0
  %v1422 = vmax.f32 %v1282, 0.0
  %v1423 = vmax.f32 %v1115, 0.0
  %v1424 = vmax.f32 %v1284, 0.0
  %v1425 = vmax.f32 %v1118, 0.0
  %v1426 = vmax.f32 %v1287, 0.0
  %v1427 = vmax.f32 %v1120, 0.0
  %v1428 = vmax.f32 %v1289, 0.0
  %v1429 = vmax.f32 %v1123, 0.0
  %v1430 = vmax.f32 %v1292, 0.0
  %v1431 = vmax.f32 %v1125, 0.0
  %v1432 = vmax.f32 %v1294, 0.0
  %v1433 = vmax.f32 %v1128, 0.0
  %v1434 = vmax.f32 %v1297, 0.0
  %v1435 = vmax.f32 %v1130, 0.0
  %v1436 = vmax.f32 %v1299, 0.0
  %v1437 = vmax.f32 %v1133, 0.0
  %v1438 = vmax.f32 %v1302, 0.0
  %v1439 = vmax.f32 %v1135, 0.0
  %v1440 = vmax.f32 %v1304, 0.0
  %v1441 = vmax.f32 %v1138, 0.0
  %v1442 = vmax.f32 %v1307, 0.0
  %v1443 = vmax.f32 %v1140, 0.0
  %v1444 = vmax.f32 %v1309, 0.0
  %v1445 = vmax.f32 %v1143, 0.0
  %v1446 = vmax.f32 %v1312, 0.0
  %v1447 = vmax.f32 %v1145, 0.0
  %v1448 = vmax.f32 %v1314, 0.0
  %v1449 = vmax.f32 %v1148, 0.0
  %v1450 = vmax.f32 %v1317, 0.0
  %v1451 = vmax.f32 %v1150, 0.0
  %v1452 = vmax.f32 %v1319, 0.0
  %v1453 = vmax.f32 %v1153, 0.0
  %v1454 = vmax.f32 %v1322, 0.0
  %v1455 = vmax.f32 %v1155, 0.0
  %v1456 = vmax.f32 %v1324, 0.0
  %v1457 = vmax.f32 %v1158, 0.0
  %v1458 = vmax.f32 %v1327, 0.0
  %v1459 = vmax.f32 %v1160, 0.0
  %v1460 = vmax.f32 %v1329, 0.0
  %v1461 = vmax.f32 %v1163, 0.0
  %v1462 = vmax.f32 %v1332, 0.0
  %v1463 = vmax.f32 %v1165, 0.0
  %v1464 = vmax.f32 %v1334, 0.0
  %v1465 = vmax.f32 %v1168, 0.0
  %v1466 = vmax.f32 %v1337, 0.0
  %v1467 = vmax.f32 %v1170, 0.0
  %v1468 = vmax.f32 %v1339, 0.0
  %v1469 = vpack.c.bf16 %v1343, %v1341
  %v1470 = vpack.c.bf16 %v1344, %v1342
  %v1471 = vpack.c.bf16 %v1347, %v1345
  %v1472 = vpack.c.bf16 %v1348, %v1346
  %v1473 = vpack.c.bf16 %v1351, %v1349
  %v1474 = vpack.c.bf16 %v1352, %v1350
  %v1475 = vpack.c.bf16 %v1355, %v1353
  %v1476 = vpack.c.bf16 %v1356, %v1354
  %v1477 = vpack.c.bf16 %v1359, %v1357
  %v1478 = vpack.c.bf16 %v1360, %v1358
  %v1479 = vpack.c.bf16 %v1363, %v1361
  %v1480 = vpack.c.bf16 %v1364, %v1362
  %v1481 = vpack.c.bf16 %v1367, %v1365
  %v1482 = vpack.c.bf16 %v1368, %v1366
  %v1483 = vpack.c.bf16 %v1371, %v1369
  %v1484 = vpack.c.bf16 %v1372, %v1370
  %v1485 = vpack.c.bf16 %v1375, %v1373
  %v1486 = vpack.c.bf16 %v1376, %v1374
  %v1487 = vpack.c.bf16 %v1379, %v1377
  %v1488 = vpack.c.bf16 %v1380, %v1378
  %v1489 = vpack.c.bf16 %v1383, %v1381
  %v1490 = vpack.c.bf16 %v1384, %v1382
  %v1491 = vpack.c.bf16 %v1387, %v1385
  %v1492 = vpack.c.bf16 %v1388, %v1386
  %v1493 = vpack.c.bf16 %v1391, %v1389
  %v1494 = vpack.c.bf16 %v1392, %v1390
  %v1495 = vpack.c.bf16 %v1395, %v1393
  %v1496 = vpack.c.bf16 %v1396, %v1394
  %v1497 = vpack.c.bf16 %v1399, %v1397
  %v1498 = vpack.c.bf16 %v1400, %v1398
  %v1499 = vpack.c.bf16 %v1403, %v1401
  %v1500 = vpack.c.bf16 %v1404, %v1402
  %v1501 = vpack.c.bf16 %v1407, %v1405
  %v1502 = vpack.c.bf16 %v1408, %v1406
  %v1503 = vpack.c.bf16 %v1411, %v1409
  %v1504 = vpack.c.bf16 %v1412, %v1410
  %v1505 = vpack.c.bf16 %v1415, %v1413
  %v1506 = vpack.c.bf16 %v1416, %v1414
  %v1507 = vpack.c.bf16 %v1419, %v1417
  %v1508 = vpack.c.bf16 %v1420, %v1418
  %v1509 = vpack.c.bf16 %v1423, %v1421
  %v1510 = vpack.c.bf16 %v1424, %v1422
  %v1511 = vpack.c.bf16 %v1427, %v1425
  %v1512 = vpack.c.bf16 %v1428, %v1426
  %v1513 = vpack.c.bf16 %v1431, %v1429
  %v1514 = vpack.c.bf16 %v1432, %v1430
  %v1515 = vpack.c.bf16 %v1435, %v1433
  %v1516 = vpack.c.bf16 %v1436, %v1434
  %v1517 = vpack.c.bf16 %v1439, %v1437
  %v1518 = vpack.c.bf16 %v1440, %v1438
  %v1519 = vpack.c.bf16 %v1443, %v1441
  %v1520 = vpack.c.bf16 %v1444, %v1442
  %v1521 = vpack.c.bf16 %v1447, %v1445
  %v1522 = vpack.c.bf16 %v1448, %v1446
  %v1523 = vpack.c.bf16 %v1451, %v1449
  %v1524 = vpack.c.bf16 %v1452, %v1450
  %v1525 = vpack.c.bf16 %v1455, %v1453
  %v1526 = vpack.c.bf16 %v1456, %v1454
  %v1527 = vpack.c.bf16 %v1459, %v1457
  %v1528 = vpack.c.bf16 %v1460, %v1458
  %v1529 = vpack.c.bf16 %v1463, %v1461
  %v1530 = vpack.c.bf16 %v1464, %v1462
  %v1531 = vpack.c.bf16 %v1467, %v1465
  %v1532 = vpack.c.bf16 %v1468, %v1466
  %v1533 = vld [vmem:[%s7] sm:$0xf]
  %v1534 = vld [vmem:[%s7 + $0x4] sm:$0xf]
  %v1535 = vld [vmem:[%s7 + $0x8] sm:$0xf]
  %v1536 = vld [vmem:[%s7 + $0xc] sm:$0xf]
  %v1537 = vld [vmem:[%s7 + $0x10] sm:$0xf]
  %v1538 = vld [vmem:[%s7 + $0x14] sm:$0xf]
  %v1539 = vld [vmem:[%s7 + $0x18] sm:$0xf]
  %v1540 = vld [vmem:[%s7 + $0x1c] sm:$0xf]
  %v1541 = vld [vmem:[%s7 + $0x20] sm:$0xf]
  %v1542 = vld [vmem:[%s7 + $0x24] sm:$0xf]
  %v1543 = vld [vmem:[%s7 + $0x28] sm:$0xf]
  %v1544 = vld [vmem:[%s7 + $0x2c] sm:$0xf]
  %v1545 = vld [vmem:[%s7 + $0x30] sm:$0xf]
  %v1546 = vld [vmem:[%s7 + $0x34] sm:$0xf]
  %v1547 = vld [vmem:[%s7 + $0x38] sm:$0xf]
  %v1548 = vld [vmem:[%s7 + $0x3c] sm:$0xf]
  %v1549 = vld [vmem:[%s7 + $0x40] sm:$0xf]
  %v1550 = vld [vmem:[%s7 + $0x44] sm:$0xf]
  %v1551 = vld [vmem:[%s7 + $0x48] sm:$0xf]
  %v1552 = vld [vmem:[%s7 + $0x4c] sm:$0xf]
  %v1553 = vld [vmem:[%s7 + $0x50] sm:$0xf]
  %v1554 = vld [vmem:[%s7 + $0x54] sm:$0xf]
  %v1555 = vld [vmem:[%s7 + $0x58] sm:$0xf]
  %v1556 = vld [vmem:[%s7 + $0x5c] sm:$0xf]
  %v1557 = vld [vmem:[%s7 + $0x60] sm:$0xf]
  %v1558 = vld [vmem:[%s7 + $0x64] sm:$0xf]
  %v1559 = vld [vmem:[%s7 + $0x68] sm:$0xf]
  %v1560 = vld [vmem:[%s7 + $0x6c] sm:$0xf]
  %v1561 = vld [vmem:[%s7 + $0x70] sm:$0xf]
  %v1562 = vld [vmem:[%s7 + $0x74] sm:$0xf]
  %v1563 = vld [vmem:[%s7 + $0x78] sm:$0xf]
  %v1564 = vld [vmem:[%s7 + $0x7c] sm:$0xf]
  %v1565 = vld [vmem:[%s8] sm:$0x1]
  %v1567 = vperm.slane %v1565, 0
  %v1601 = vunpack.c.l.b16 %v1533
  %v1602 = vunpack.c.l.b16 %v1534
  %v1603 = vunpack.c.l.b16 %v1535
  %v1604 = vunpack.c.l.b16 %v1536
  %v1605 = vunpack.c.l.b16 %v1537
  %v1606 = vunpack.c.l.b16 %v1538
  %v1607 = vunpack.c.l.b16 %v1539
  %v1608 = vunpack.c.l.b16 %v1540
  %v1609 = vunpack.c.l.b16 %v1541
  %v1610 = vunpack.c.l.b16 %v1542
  %v1611 = vunpack.c.l.b16 %v1543
  %v1612 = vunpack.c.l.b16 %v1544
  %v1613 = vunpack.c.l.b16 %v1545
  %v1614 = vunpack.c.l.b16 %v1546
  %v1615 = vunpack.c.l.b16 %v1547
  %v1616 = vunpack.c.l.b16 %v1548
  %v1617 = vunpack.c.l.b16 %v1549
  %v1618 = vunpack.c.l.b16 %v1550
  %v1619 = vunpack.c.l.b16 %v1551
  %v1620 = vunpack.c.l.b16 %v1552
  %v1621 = vunpack.c.l.b16 %v1553
  %v1622 = vunpack.c.l.b16 %v1554
  %v1623 = vunpack.c.l.b16 %v1555
  %v1624 = vunpack.c.l.b16 %v1556
  %v1625 = vunpack.c.l.b16 %v1557
  %v1626 = vunpack.c.l.b16 %v1558
  %v1627 = vunpack.c.l.b16 %v1559
  %v1628 = vunpack.c.l.b16 %v1560
  %v1629 = vunpack.c.l.b16 %v1561
  %v1630 = vunpack.c.l.b16 %v1562
  %v1631 = vunpack.c.l.b16 %v1563
  %v1632 = vunpack.c.l.b16 %v1564
  %v1633 = vpack.c.b16 %v1602, %v1601
  %v1634 = vpack.c.b16 %v1604, %v1603
  %v1635 = vpack.c.b16 %v1606, %v1605
  %v1636 = vpack.c.b16 %v1608, %v1607
  %v1637 = vpack.c.b16 %v1610, %v1609
  %v1638 = vpack.c.b16 %v1612, %v1611
  %v1639 = vpack.c.b16 %v1614, %v1613
  %v1640 = vpack.c.b16 %v1616, %v1615
  %v1641 = vpack.c.b16 %v1618, %v1617
  %v1642 = vpack.c.b16 %v1620, %v1619
  %v1643 = vpack.c.b16 %v1622, %v1621
  %v1644 = vpack.c.b16 %v1624, %v1623
  %v1645 = vpack.c.b16 %v1626, %v1625
  %v1646 = vpack.c.b16 %v1628, %v1627
  %v1647 = vpack.c.b16 %v1630, %v1629
  %v1648 = vpack.c.b16 %v1632, %v1631
  %1665 = vmatpush.bf16.msra.mxu0 %v1640
  %1666 = vmatpush.bf16.msra.mxu0 %v1639
  %1667 = vmatpush.bf16.msra.mxu0 %v1638
  %1668 = vmatpush.bf16.msra.mxu0 %v1637
  %1669 = vmatpush.bf16.msra.mxu0 %v1636
  %1670 = vmatpush.bf16.msra.mxu0 %v1635
  %1671 = vmatpush.bf16.msra.mxu0 %v1634
  %1672 = vmatpush.bf16.msra.mxu0 %v1633
  %1673 = vmatmul.bf16.gmra.mxu0 %v1469
  %v1674 = vpop.f32.mrf.mxu0
  %v1675 = vadd.f32 %v1567, %v1674
  %v1676 = vpop.f32.mrf.mxu0
  %v1677 = vadd.f32 %v1567, %v1676
  %1678 = vmatmul.bf16.gmra.mxu0 %v1471
  %v1679 = vpop.f32.mrf.mxu0
  %v1680 = vadd.f32 %v1567, %v1679
  %v1681 = vpop.f32.mrf.mxu0
  %v1682 = vadd.f32 %v1567, %v1681
  %1683 = vmatmul.bf16.gmra.mxu0 %v1473
  %v1684 = vpop.f32.mrf.mxu0
  %v1685 = vadd.f32 %v1567, %v1684
  %v1686 = vpop.f32.mrf.mxu0
  %v1687 = vadd.f32 %v1567, %v1686
  %1688 = vmatmul.bf16.gmra.mxu0 %v1475
  %v1689 = vpop.f32.mrf.mxu0
  %v1690 = vadd.f32 %v1567, %v1689
  %v1691 = vpop.f32.mrf.mxu0
  %v1692 = vadd.f32 %v1567, %v1691
  %1693 = vmatmul.bf16.gmra.mxu0 %v1477
  %v1694 = vpop.f32.mrf.mxu0
  %v1695 = vadd.f32 %v1567, %v1694
  %v1696 = vpop.f32.mrf.mxu0
  %v1697 = vadd.f32 %v1567, %v1696
  %1698 = vmatmul.bf16.gmra.mxu0 %v1479
  %v1699 = vpop.f32.mrf.mxu0
  %v1700 = vadd.f32 %v1567, %v1699
  %v1701 = vpop.f32.mrf.mxu0
  %v1702 = vadd.f32 %v1567, %v1701
  %1703 = vmatmul.bf16.gmra.mxu0 %v1481
  %v1704 = vpop.f32.mrf.mxu0
  %v1705 = vadd.f32 %v1567, %v1704
  %v1706 = vpop.f32.mrf.mxu0
  %v1707 = vadd.f32 %v1567, %v1706
  %1708 = vmatmul.bf16.gmra.mxu0 %v1483
  %v1709 = vpop.f32.mrf.mxu0
  %v1710 = vadd.f32 %v1567, %v1709
  %v1711 = vpop.f32.mrf.mxu0
  %v1712 = vadd.f32 %v1567, %v1711
  %1713 = vmatmul.bf16.gmra.mxu0 %v1485
  %v1714 = vpop.f32.mrf.mxu0
  %v1715 = vadd.f32 %v1567, %v1714
  %v1716 = vpop.f32.mrf.mxu0
  %v1717 = vadd.f32 %v1567, %v1716
  %1718 = vmatmul.bf16.gmra.mxu0 %v1487
  %v1719 = vpop.f32.mrf.mxu0
  %v1720 = vadd.f32 %v1567, %v1719
  %v1721 = vpop.f32.mrf.mxu0
  %v1722 = vadd.f32 %v1567, %v1721
  %1723 = vmatmul.bf16.gmra.mxu0 %v1489
  %v1724 = vpop.f32.mrf.mxu0
  %v1725 = vadd.f32 %v1567, %v1724
  %v1726 = vpop.f32.mrf.mxu0
  %v1727 = vadd.f32 %v1567, %v1726
  %1728 = vmatmul.bf16.gmra.mxu0 %v1491
  %v1729 = vpop.f32.mrf.mxu0
  %v1730 = vadd.f32 %v1567, %v1729
  %v1731 = vpop.f32.mrf.mxu0
  %v1732 = vadd.f32 %v1567, %v1731
  %1733 = vmatmul.bf16.gmra.mxu0 %v1493
  %v1734 = vpop.f32.mrf.mxu0
  %v1735 = vadd.f32 %v1567, %v1734
  %v1736 = vpop.f32.mrf.mxu0
  %v1737 = vadd.f32 %v1567, %v1736
  %1738 = vmatmul.bf16.gmra.mxu0 %v1495
  %v1739 = vpop.f32.mrf.mxu0
  %v1740 = vadd.f32 %v1567, %v1739
  %v1741 = vpop.f32.mrf.mxu0
  %v1742 = vadd.f32 %v1567, %v1741
  %1743 = vmatmul.bf16.gmra.mxu0 %v1497
  %v1744 = vpop.f32.mrf.mxu0
  %v1745 = vadd.f32 %v1567, %v1744
  %v1746 = vpop.f32.mrf.mxu0
  %v1747 = vadd.f32 %v1567, %v1746
  %1748 = vmatmul.bf16.gmra.mxu0 %v1499
  %v1749 = vpop.f32.mrf.mxu0
  %v1750 = vadd.f32 %v1567, %v1749
  %v1751 = vpop.f32.mrf.mxu0
  %v1752 = vadd.f32 %v1567, %v1751
  %1753 = vmatmul.bf16.gmra.mxu0 %v1501
  %v1754 = vpop.f32.mrf.mxu0
  %v1755 = vadd.f32 %v1567, %v1754
  %v1756 = vpop.f32.mrf.mxu0
  %v1757 = vadd.f32 %v1567, %v1756
  %1758 = vmatmul.bf16.gmra.mxu0 %v1503
  %v1759 = vpop.f32.mrf.mxu0
  %v1760 = vadd.f32 %v1567, %v1759
  %v1761 = vpop.f32.mrf.mxu0
  %v1762 = vadd.f32 %v1567, %v1761
  %1763 = vmatmul.bf16.gmra.mxu0 %v1505
  %v1764 = vpop.f32.mrf.mxu0
  %v1765 = vadd.f32 %v1567, %v1764
  %v1766 = vpop.f32.mrf.mxu0
  %v1767 = vadd.f32 %v1567, %v1766
  %1768 = vmatmul.bf16.gmra.mxu0 %v1507
  %v1769 = vpop.f32.mrf.mxu0
  %v1770 = vadd.f32 %v1567, %v1769
  %v1771 = vpop.f32.mrf.mxu0
  %v1772 = vadd.f32 %v1567, %v1771
  %1773 = vmatmul.bf16.gmra.mxu0 %v1509
  %v1774 = vpop.f32.mrf.mxu0
  %v1775 = vadd.f32 %v1567, %v1774
  %v1776 = vpop.f32.mrf.mxu0
  %v1777 = vadd.f32 %v1567, %v1776
  %1778 = vmatmul.bf16.gmra.mxu0 %v1511
  %v1779 = vpop.f32.mrf.mxu0
  %v1780 = vadd.f32 %v1567, %v1779
  %v1781 = vpop.f32.mrf.mxu0
  %v1782 = vadd.f32 %v1567, %v1781
  %1783 = vmatmul.bf16.gmra.mxu0 %v1513
  %v1784 = vpop.f32.mrf.mxu0
  %v1785 = vadd.f32 %v1567, %v1784
  %v1786 = vpop.f32.mrf.mxu0
  %v1787 = vadd.f32 %v1567, %v1786
  %1788 = vmatmul.bf16.gmra.mxu0 %v1515
  %v1789 = vpop.f32.mrf.mxu0
  %v1790 = vadd.f32 %v1567, %v1789
  %v1791 = vpop.f32.mrf.mxu0
  %v1792 = vadd.f32 %v1567, %v1791
  %1793 = vmatmul.bf16.gmra.mxu0 %v1517
  %v1794 = vpop.f32.mrf.mxu0
  %v1795 = vadd.f32 %v1567, %v1794
  %v1796 = vpop.f32.mrf.mxu0
  %v1797 = vadd.f32 %v1567, %v1796
  %1798 = vmatmul.bf16.gmra.mxu0 %v1519
  %v1799 = vpop.f32.mrf.mxu0
  %v1800 = vadd.f32 %v1567, %v1799
  %v1801 = vpop.f32.mrf.mxu0
  %v1802 = vadd.f32 %v1567, %v1801
  %1803 = vmatmul.bf16.gmra.mxu0 %v1521
  %v1804 = vpop.f32.mrf.mxu0
  %v1805 = vadd.f32 %v1567, %v1804
  %v1806 = vpop.f32.mrf.mxu0
  %v1807 = vadd.f32 %v1567, %v1806
  %1808 = vmatmul.bf16.gmra.mxu0 %v1523
  %v1809 = vpop.f32.mrf.mxu0
  %v1810 = vadd.f32 %v1567, %v1809
  %v1811 = vpop.f32.mrf.mxu0
  %v1812 = vadd.f32 %v1567, %v1811
  %1813 = vmatmul.bf16.gmra.mxu0 %v1525
  %v1814 = vpop.f32.mrf.mxu0
  %v1815 = vadd.f32 %v1567, %v1814
  %v1816 = vpop.f32.mrf.mxu0
  %v1817 = vadd.f32 %v1567, %v1816
  %1818 = vmatmul.bf16.gmra.mxu0 %v1527
  %v1819 = vpop.f32.mrf.mxu0
  %v1820 = vadd.f32 %v1567, %v1819
  %v1821 = vpop.f32.mrf.mxu0
  %v1822 = vadd.f32 %v1567, %v1821
  %1823 = vmatmul.bf16.gmra.mxu0 %v1529
  %v1824 = vpop.f32.mrf.mxu0
  %v1825 = vadd.f32 %v1567, %v1824
  %v1826 = vpop.f32.mrf.mxu0
  %v1827 = vadd.f32 %v1567, %v1826
  %1828 = vmatmul.bf16.gmra.mxu0 %v1531
  %v1829 = vpop.f32.mrf.mxu0
  %v1830 = vadd.f32 %v1567, %v1829
  %v1831 = vpop.f32.mrf.mxu0
  %v1832 = vadd.f32 %v1567, %v1831
  %1833 = vdwg.mxu0
  %1834 = vmatpush.bf16.msra.mxu0 %v1648
  %1835 = vmatpush.bf16.msra.mxu0 %v1647
  %1836 = vmatpush.bf16.msra.mxu0 %v1646
  %1837 = vmatpush.bf16.msra.mxu0 %v1645
  %1838 = vmatpush.bf16.msra.mxu0 %v1644
  %1839 = vmatpush.bf16.msra.mxu0 %v1643
  %1840 = vmatpush.bf16.msra.mxu0 %v1642
  %1841 = vmatpush.bf16.msra.mxu0 %v1641
  %1842 = vmatmul.bf16.gmra.mxu0 %v1470
  %v1843 = vpop.f32.mrf.mxu0
  %v1844 = vadd.f32 %v1675, %v1843
  %v1845 = vpop.f32.mrf.mxu0
  %v1846 = vadd.f32 %v1677, %v1845
  %1847 = vmatmul.bf16.gmra.mxu0 %v1472
  %v1848 = vpop.f32.mrf.mxu0
  %v1849 = vadd.f32 %v1680, %v1848
  %v1850 = vpop.f32.mrf.mxu0
  %v1851 = vadd.f32 %v1682, %v1850
  %1852 = vmatmul.bf16.gmra.mxu0 %v1474
  %v1853 = vpop.f32.mrf.mxu0
  %v1854 = vadd.f32 %v1685, %v1853
  %v1855 = vpop.f32.mrf.mxu0
  %v1856 = vadd.f32 %v1687, %v1855
  %1857 = vmatmul.bf16.gmra.mxu0 %v1476
  %v1858 = vpop.f32.mrf.mxu0
  %v1859 = vadd.f32 %v1690, %v1858
  %v1860 = vpop.f32.mrf.mxu0
  %v1861 = vadd.f32 %v1692, %v1860
  %1862 = vmatmul.bf16.gmra.mxu0 %v1478
  %v1863 = vpop.f32.mrf.mxu0
  %v1864 = vadd.f32 %v1695, %v1863
  %v1865 = vpop.f32.mrf.mxu0
  %v1866 = vadd.f32 %v1697, %v1865
  %1867 = vmatmul.bf16.gmra.mxu0 %v1480
  %v1868 = vpop.f32.mrf.mxu0
  %v1869 = vadd.f32 %v1700, %v1868
  %v1870 = vpop.f32.mrf.mxu0
  %v1871 = vadd.f32 %v1702, %v1870
  %1872 = vmatmul.bf16.gmra.mxu0 %v1482
  %v1873 = vpop.f32.mrf.mxu0
  %v1874 = vadd.f32 %v1705, %v1873
  %v1875 = vpop.f32.mrf.mxu0
  %v1876 = vadd.f32 %v1707, %v1875
  %1877 = vmatmul.bf16.gmra.mxu0 %v1484
  %v1878 = vpop.f32.mrf.mxu0
  %v1879 = vadd.f32 %v1710, %v1878
  %v1880 = vpop.f32.mrf.mxu0
  %v1881 = vadd.f32 %v1712, %v1880
  %1882 = vmatmul.bf16.gmra.mxu0 %v1486
  %v1883 = vpop.f32.mrf.mxu0
  %v1884 = vadd.f32 %v1715, %v1883
  %v1885 = vpop.f32.mrf.mxu0
  %v1886 = vadd.f32 %v1717, %v1885
  %1887 = vmatmul.bf16.gmra.mxu0 %v1488
  %v1888 = vpop.f32.mrf.mxu0
  %v1889 = vadd.f32 %v1720, %v1888
  %v1890 = vpop.f32.mrf.mxu0
  %v1891 = vadd.f32 %v1722, %v1890
  %1892 = vmatmul.bf16.gmra.mxu0 %v1490
  %v1893 = vpop.f32.mrf.mxu0
  %v1894 = vadd.f32 %v1725, %v1893
  %v1895 = vpop.f32.mrf.mxu0
  %v1896 = vadd.f32 %v1727, %v1895
  %1897 = vmatmul.bf16.gmra.mxu0 %v1492
  %v1898 = vpop.f32.mrf.mxu0
  %v1899 = vadd.f32 %v1730, %v1898
  %v1900 = vpop.f32.mrf.mxu0
  %v1901 = vadd.f32 %v1732, %v1900
  %1902 = vmatmul.bf16.gmra.mxu0 %v1494
  %v1903 = vpop.f32.mrf.mxu0
  %v1904 = vadd.f32 %v1735, %v1903
  %v1905 = vpop.f32.mrf.mxu0
  %v1906 = vadd.f32 %v1737, %v1905
  %1907 = vmatmul.bf16.gmra.mxu0 %v1496
  %v1908 = vpop.f32.mrf.mxu0
  %v1909 = vadd.f32 %v1740, %v1908
  %v1910 = vpop.f32.mrf.mxu0
  %v1911 = vadd.f32 %v1742, %v1910
  %1912 = vmatmul.bf16.gmra.mxu0 %v1498
  %v1913 = vpop.f32.mrf.mxu0
  %v1914 = vadd.f32 %v1745, %v1913
  %v1915 = vpop.f32.mrf.mxu0
  %v1916 = vadd.f32 %v1747, %v1915
  %1917 = vmatmul.bf16.gmra.mxu0 %v1500
  %v1918 = vpop.f32.mrf.mxu0
  %v1919 = vadd.f32 %v1750, %v1918
  %v1920 = vpop.f32.mrf.mxu0
  %v1921 = vadd.f32 %v1752, %v1920
  %1922 = vmatmul.bf16.gmra.mxu0 %v1502
  %v1923 = vpop.f32.mrf.mxu0
  %v1924 = vadd.f32 %v1755, %v1923
  %v1925 = vpop.f32.mrf.mxu0
  %v1926 = vadd.f32 %v1757, %v1925
  %1927 = vmatmul.bf16.gmra.mxu0 %v1504
  %v1928 = vpop.f32.mrf.mxu0
  %v1929 = vadd.f32 %v1760, %v1928
  %v1930 = vpop.f32.mrf.mxu0
  %v1931 = vadd.f32 %v1762, %v1930
  %1932 = vmatmul.bf16.gmra.mxu0 %v1506
  %v1933 = vpop.f32.mrf.mxu0
  %v1934 = vadd.f32 %v1765, %v1933
  %v1935 = vpop.f32.mrf.mxu0
  %v1936 = vadd.f32 %v1767, %v1935
  %1937 = vmatmul.bf16.gmra.mxu0 %v1508
  %v1938 = vpop.f32.mrf.mxu0
  %v1939 = vadd.f32 %v1770, %v1938
  %v1940 = vpop.f32.mrf.mxu0
  %v1941 = vadd.f32 %v1772, %v1940
  %1942 = vmatmul.bf16.gmra.mxu0 %v1510
  %v1943 = vpop.f32.mrf.mxu0
  %v1944 = vadd.f32 %v1775, %v1943
  %v1945 = vpop.f32.mrf.mxu0
  %v1946 = vadd.f32 %v1777, %v1945
  %1947 = vmatmul.bf16.gmra.mxu0 %v1512
  %v1948 = vpop.f32.mrf.mxu0
  %v1949 = vadd.f32 %v1780, %v1948
  %v1950 = vpop.f32.mrf.mxu0
  %v1951 = vadd.f32 %v1782, %v1950
  %1952 = vmatmul.bf16.gmra.mxu0 %v1514
  %v1953 = vpop.f32.mrf.mxu0
  %v1954 = vadd.f32 %v1785, %v1953
  %v1955 = vpop.f32.mrf.mxu0
  %v1956 = vadd.f32 %v1787, %v1955
  %1957 = vmatmul.bf16.gmra.mxu0 %v1516
  %v1958 = vpop.f32.mrf.mxu0
  %v1959 = vadd.f32 %v1790, %v1958
  %v1960 = vpop.f32.mrf.mxu0
  %v1961 = vadd.f32 %v1792, %v1960
  %1962 = vmatmul.bf16.gmra.mxu0 %v1518
  %v1963 = vpop.f32.mrf.mxu0
  %v1964 = vadd.f32 %v1795, %v1963
  %v1965 = vpop.f32.mrf.mxu0
  %v1966 = vadd.f32 %v1797, %v1965
  %1967 = vmatmul.bf16.gmra.mxu0 %v1520
  %v1968 = vpop.f32.mrf.mxu0
  %v1969 = vadd.f32 %v1800, %v1968
  %v1970 = vpop.f32.mrf.mxu0
  %v1971 = vadd.f32 %v1802, %v1970
  %1972 = vmatmul.bf16.gmra.mxu0 %v1522
  %v1973 = vpop.f32.mrf.mxu0
  %v1974 = vadd.f32 %v1805, %v1973
  %v1975 = vpop.f32.mrf.mxu0
  %v1976 = vadd.f32 %v1807, %v1975
  %1977 = vmatmul.bf16.gmra.mxu0 %v1524
  %v1978 = vpop.f32.mrf.mxu0
  %v1979 = vadd.f32 %v1810, %v1978
  %v1980 = vpop.f32.mrf.mxu0
  %v1981 = vadd.f32 %v1812, %v1980
  %1982 = vmatmul.bf16.gmra.mxu0 %v1526
  %v1983 = vpop.f32.mrf.mxu0
  %v1984 = vadd.f32 %v1815, %v1983
  %v1985 = vpop.f32.mrf.mxu0
  %v1986 = vadd.f32 %v1817, %v1985
  %1987 = vmatmul.bf16.gmra.mxu0 %v1528
  %v1988 = vpop.f32.mrf.mxu0
  %v1989 = vadd.f32 %v1820, %v1988
  %v1990 = vpop.f32.mrf.mxu0
  %v1991 = vadd.f32 %v1822, %v1990
  %1992 = vmatmul.bf16.gmra.mxu0 %v1530
  %v1993 = vpop.f32.mrf.mxu0
  %v1994 = vadd.f32 %v1825, %v1993
  %v1995 = vpop.f32.mrf.mxu0
  %v1996 = vadd.f32 %v1827, %v1995
  %1997 = vmatmul.bf16.gmra.mxu0 %v1532
  %v1998 = vpop.f32.mrf.mxu0
  %v1999 = vadd.f32 %v1830, %v1998
  %v2000 = vpop.f32.mrf.mxu0
  %v2001 = vadd.f32 %v1832, %v2000
  %2002 = vdwg.mxu0
  %2003 = vst.msk [vmem:[%s9] sm:$0xff] %vm539, %v1844
  %2004 = vst.msk [vmem:[%s9 + $0x8] sm:$0xff] %vm539, %v1846
  %2005 = vst.msk [vmem:[%s9 + $0x10] sm:$0xff] %vm539, %v1849
  %2006 = vst.msk [vmem:[%s9 + $0x18] sm:$0xff] %vm539, %v1851
  %2007 = vst.msk [vmem:[%s9 + $0x20] sm:$0xff] %vm539, %v1854
  %2008 = vst.msk [vmem:[%s9 + $0x28] sm:$0xff] %vm539, %v1856
  %2009 = vst.msk [vmem:[%s9 + $0x30] sm:$0xff] %vm539, %v1859
  %2010 = vst.msk [vmem:[%s9 + $0x38] sm:$0xff] %vm539, %v1861
  %2011 = vst.msk [vmem:[%s9 + $0x40] sm:$0xff] %vm539, %v1864
  %2012 = vst.msk [vmem:[%s9 + $0x48] sm:$0xff] %vm539, %v1866
  %2013 = vst.msk [vmem:[%s9 + $0x50] sm:$0xff] %vm539, %v1869
  %2014 = vst.msk [vmem:[%s9 + $0x58] sm:$0xff] %vm539, %v1871
  %2015 = vst.msk [vmem:[%s9 + $0x60] sm:$0xff] %vm539, %v1874
  %2016 = vst.msk [vmem:[%s9 + $0x68] sm:$0xff] %vm539, %v1876
  %2017 = vst.msk [vmem:[%s9 + $0x70] sm:$0xff] %vm539, %v1879
  %2018 = vst.msk [vmem:[%s9 + $0x78] sm:$0xff] %vm539, %v1881
  %2019 = vst.msk [vmem:[%s9 + $0x80] sm:$0xff] %vm539, %v1884
  %2020 = vst.msk [vmem:[%s9 + $0x88] sm:$0xff] %vm539, %v1886
  %2021 = vst.msk [vmem:[%s9 + $0x90] sm:$0xff] %vm539, %v1889
  %2022 = vst.msk [vmem:[%s9 + $0x98] sm:$0xff] %vm539, %v1891
  %2023 = vst.msk [vmem:[%s9 + $0xa0] sm:$0xff] %vm539, %v1894
  %2024 = vst.msk [vmem:[%s9 + $0xa8] sm:$0xff] %vm539, %v1896
  %2025 = vst.msk [vmem:[%s9 + $0xb0] sm:$0xff] %vm539, %v1899
  %2026 = vst.msk [vmem:[%s9 + $0xb8] sm:$0xff] %vm539, %v1901
  %2027 = vst.msk [vmem:[%s9 + $0xc0] sm:$0xff] %vm539, %v1904
  %2028 = vst.msk [vmem:[%s9 + $0xc8] sm:$0xff] %vm539, %v1906
  %2029 = vst.msk [vmem:[%s9 + $0xd0] sm:$0xff] %vm539, %v1909
  %2030 = vst.msk [vmem:[%s9 + $0xd8] sm:$0xff] %vm539, %v1911
  %2031 = vst.msk [vmem:[%s9 + $0xe0] sm:$0xff] %vm539, %v1914
  %2032 = vst.msk [vmem:[%s9 + $0xe8] sm:$0xff] %vm539, %v1916
  %2033 = vst.msk [vmem:[%s9 + $0xf0] sm:$0xff] %vm539, %v1919
  %2034 = vst.msk [vmem:[%s9 + $0xf8] sm:$0xff] %vm539, %v1921
  %2035 = vst.msk [vmem:[%s9 + $0x100] sm:$0xff] %vm539, %v1924
  %2036 = vst.msk [vmem:[%s9 + $0x108] sm:$0xff] %vm539, %v1926
  %2037 = vst.msk [vmem:[%s9 + $0x110] sm:$0xff] %vm539, %v1929
  %2038 = vst.msk [vmem:[%s9 + $0x118] sm:$0xff] %vm539, %v1931
  %2039 = vst.msk [vmem:[%s9 + $0x120] sm:$0xff] %vm539, %v1934
  %2040 = vst.msk [vmem:[%s9 + $0x128] sm:$0xff] %vm539, %v1936
  %2041 = vst.msk [vmem:[%s9 + $0x130] sm:$0xff] %vm539, %v1939
  %2042 = vst.msk [vmem:[%s9 + $0x138] sm:$0xff] %vm539, %v1941
  %2043 = vst.msk [vmem:[%s9 + $0x140] sm:$0xff] %vm539, %v1944
  %2044 = vst.msk [vmem:[%s9 + $0x148] sm:$0xff] %vm539, %v1946
  %2045 = vst.msk [vmem:[%s9 + $0x150] sm:$0xff] %vm539, %v1949
  %2046 = vst.msk [vmem:[%s9 + $0x158] sm:$0xff] %vm539, %v1951
  %2047 = vst.msk [vmem:[%s9 + $0x160] sm:$0xff] %vm539, %v1954
  %2048 = vst.msk [vmem:[%s9 + $0x168] sm:$0xff] %vm539, %v1956
  %2049 = vst.msk [vmem:[%s9 + $0x170] sm:$0xff] %vm539, %v1959
  %2050 = vst.msk [vmem:[%s9 + $0x178] sm:$0xff] %vm539, %v1961
  %2051 = vst.msk [vmem:[%s9 + $0x180] sm:$0xff] %vm539, %v1964
  %2052 = vst.msk [vmem:[%s9 + $0x188] sm:$0xff] %vm539, %v1966
  %2053 = vst.msk [vmem:[%s9 + $0x190] sm:$0xff] %vm539, %v1969
  %2054 = vst.msk [vmem:[%s9 + $0x198] sm:$0xff] %vm539, %v1971
  %2055 = vst.msk [vmem:[%s9 + $0x1a0] sm:$0xff] %vm539, %v1974
  %2056 = vst.msk [vmem:[%s9 + $0x1a8] sm:$0xff] %vm539, %v1976
  %2057 = vst.msk [vmem:[%s9 + $0x1b0] sm:$0xff] %vm539, %v1979
  %2058 = vst.msk [vmem:[%s9 + $0x1b8] sm:$0xff] %vm539, %v1981
  %2059 = vst.msk [vmem:[%s9 + $0x1c0] sm:$0xff] %vm539, %v1984
  %2060 = vst.msk [vmem:[%s9 + $0x1c8] sm:$0xff] %vm539, %v1986
  %2061 = vst.msk [vmem:[%s9 + $0x1d0] sm:$0xff] %vm539, %v1989
  %2062 = vst.msk [vmem:[%s9 + $0x1d8] sm:$0xff] %vm539, %v1991
  %2063 = vst.msk [vmem:[%s9 + $0x1e0] sm:$0xff] %vm539, %v1994
  %2064 = vst.msk [vmem:[%s9 + $0x1e8] sm:$0xff] %vm539, %v1996
  %2065 = vst.msk [vmem:[%s9 + $0x1f0] sm:$0xff] %vm539, %v1999
  %2066 = vst.msk [vmem:[%s9 + $0x1f8] sm:$0xff] %vm539, %v2001
  // Predicated region
  $region38: #{tpu_custom_call.1} parent=0 // pred_check
    _
  $region39: #{tpu_custom_call.1} parent=0 // pred_check_branch
    %2068 = sbr.rel (0) target = $region41
  $region40: #{tpu_custom_call.1} parent=0 // pred_region
    _
  $region41: #{tpu_custom_call.1} parent=0 // pred_fallthru
    _
  // Predicated region
  $region42: #{tpu_custom_call.1} parent=0 // pred_check
    _
  $region43: #{tpu_custom_call.1} parent=0 // pred_check_branch
    %2070 = sbr.rel (0) target = $region45
  $region44: #{tpu_custom_call.1} parent=0 // pred_region
    _
  $region45: #{tpu_custom_call.1} parent=0 // pred_fallthru
    _

</llo_original>
